<compile_context>
chip_gen: v7x
topology: tpu7x:2x2x1
jax: 0.10.0
libtpu: 0.0.40
codegen_flags: <defaults>
</compile_context>

<pallas_src>
import math

import jax
import jax.numpy as jnp
import numpy as np
from jax.experimental import pallas as pl
from jax.experimental.pallas import tpu as pltpu


def make_attention_block_kernel(T, TQ, E, num_head):
    hs = E // num_head
    scale = 1.0 / math.sqrt(hs)
    H = num_head

    def kernel(xq_ref, xf_ref, wq_ref, wkv_ref, wproj_ref, bproj_ref,
               g1_ref, b1_ref, g2_ref, b2_ref,
               w1_ref, bf1_ref, w2_ref, bf2_ref, o_ref):
        x_q = xq_ref[0].astype(jnp.float32)     # (TQ, E) query / residual tile
        x_f = xf_ref[0].astype(jnp.float32)     # (T,  E) full context for K/V

        def layernorm(h, g_ref, b_ref):
            mu = jnp.mean(h, axis=-1, keepdims=True)
            var = jnp.mean(jnp.square(h - mu), axis=-1, keepdims=True)
            return (h - mu) * jax.lax.rsqrt(var + 1e-5) * g_ref[...] + b_ref[...]

        # ---- LN1 + projections (bf16 MXU operands, f32 accumulation) ----
        h1_q = layernorm(x_q, g1_ref, b1_ref).astype(jnp.bfloat16)
        h1_f = layernorm(x_f, g1_ref, b1_ref).astype(jnp.bfloat16)

        q = jnp.dot(h1_q, wq_ref[...], preferred_element_type=jnp.float32)    # (TQ, E)
        kv = jnp.dot(h1_f, wkv_ref[...], preferred_element_type=jnp.float32)  # (T, 2E)
        qb = q.astype(jnp.bfloat16)
        kb = kv[:, :E].astype(jnp.bfloat16)
        vb = kv[:, E:].astype(jnp.bfloat16)

        # Additive causal mask, computed ONCE for this query tile.
        q0 = pl.program_id(1) * TQ
        rows = q0 + jax.lax.broadcasted_iota(jnp.int32, (TQ, T), 0)
        cols = jax.lax.broadcasted_iota(jnp.int32, (TQ, T), 1)
        neg_mask = jnp.where(cols <= rows,
                             jnp.float32(0.0), jnp.float32(-jnp.inf))         # (TQ, T)

        # ---- per-head causal attention; collect outputs, write (TQ, E) once ----
        head_outs = []
        for h in range(H):                                                    # static unroll
            sl = slice(h * hs, (h + 1) * hs)
            qh, kh, vh = qb[:, sl], kb[:, sl], vb[:, sl]
            # q @ k^T without materializing an explicit transpose.
            s = jax.lax.dot_general(
                qh, kh, (((1,), (1,)), ((), ())),
                preferred_element_type=jnp.float32) * scale + neg_mask        # (TQ, T)
            m = jnp.max(s, axis=-1, keepdims=True)
            p = jnp.exp(s - m)
            l = jnp.sum(p, axis=-1, keepdims=True)
            o = jnp.dot(p.astype(jnp.bfloat16), vh,
                        preferred_element_type=jnp.float32)                   # (TQ, hs)
            # Normalization folded into the output (EUP approx reciprocal).
            head_outs.append(o * pl.reciprocal(l, approx=True))
        att = jnp.concatenate(head_outs, axis=-1)                             # (TQ, E)

        proj = jnp.dot(att.astype(jnp.bfloat16), wproj_ref[...],
                       preferred_element_type=jnp.float32) + bproj_ref[...]
        x = x_q + proj

        # ---- feed-forward on LN2(x) ----
        h2 = layernorm(x, g2_ref, b2_ref).astype(jnp.bfloat16)
        ff = jnp.dot(h2, w1_ref[...], preferred_element_type=jnp.float32) + bf1_ref[...]
        ff = jnp.maximum(ff, 0.0).astype(jnp.bfloat16)
        ff = jnp.dot(ff, w2_ref[...], preferred_element_type=jnp.float32) + bf2_ref[...]
        x = x + ff

        o_ref[0] = x.astype(o_ref.dtype)

    return kernel


def attention_block(x, params, num_head):
    B, T, E = x.shape

    # Query-tile size: full sequence for short T, 128-token tiles otherwise.
    if T <= 128:
        TQ = T
    elif T % 128 == 0:
        TQ = 128
    else:
        TQ = T   # TODO(synk): pad T to a multiple of the query tile instead.
    NQ = T // TQ

    kernel = make_attention_block_kernel(T, TQ, E, num_head)

    weights = [params["wq"], params["wkv"], params["wproj"], params["bproj"],
               params["g1"], params["b1"], params["g2"], params["b2"],
               params["w1"], params["bf1"], params["w2"], params["bf2"]]

    def full_spec(shape):
        nd = len(shape)
        # Constant-index weight blocks. (Could be single-buffered via
        # pipeline_mode=pl.Buffered(1); left default for portability.)
        return pl.BlockSpec(shape, lambda b, qi, _nd=nd: (0,) * _nd)

    in_specs = [
        pl.BlockSpec((1, TQ, E), lambda b, qi: (b, qi, 0)),   # query / residual tile
        pl.BlockSpec((1, T, E), lambda b, qi: (b, 0, 0)),     # full context for K/V
    ] + [full_spec(w.shape) for w in weights]
    out_spec = pl.BlockSpec((1, TQ, E), lambda b, qi: (b, qi, 0))

    # Explicit VMEM budget: weights + (double-buffered) activation blocks +
    # in-kernel intermediates, clamped to [32 MiB, 100 MiB].
    weight_bytes = sum(int(np.prod(w.shape)) * w.dtype.itemsize for w in weights)
    act_bytes = (TQ * E + T * E + TQ * E) * x.dtype.itemsize
    interm_bytes = 4 * (3 * T * E + 3 * TQ * E + num_head * TQ * T + TQ * 4 * E)
    vmem_limit = int(min(max(2 * (weight_bytes + act_bytes) + 2 * interm_bytes
                             + (8 << 20), 32 << 20), 100 << 20))

    return pl.pallas_call(
        kernel,
        out_shape=jax.ShapeDtypeStruct((B, T, E), x.dtype),
        grid_spec=pltpu.PrefetchScalarGridSpec(
            num_scalar_prefetch=0,
            grid=(B, NQ),
            in_specs=in_specs,
            out_specs=out_spec),
        compiler_params=pltpu.CompilerParams(
            dimension_semantics=("parallel", "parallel"),
            vmem_limit_bytes=vmem_limit),
    )(x, x, *weights)


def init_params(key, E, num_head):
    """Deterministic init; mirrors the PyTorch module's parameter shapes."""
    hs = E // num_head
    ks = jax.random.split(key, 9)

    def lin(k, fan_in, shape):
        bound = 1.0 / math.sqrt(fan_in)
        return jax.random.uniform(k, shape, jnp.float32, -bound, bound)

    # Per-head q/k/v weights: torch Linear(E, hs, bias=False) weight is (hs, E).
    Wq = lin(ks[0], E, (num_head, hs, E))
    Wk = lin(ks[1], E, (num_head, hs, E))
    Wv = lin(ks[2], E, (num_head, hs, E))
    # Combine heads: out[:, h*hs:(h+1)*hs] = x @ W[h].T  ->  (E, E) matrix.
    combine = lambda W: jnp.transpose(W, (2, 0, 1)).reshape(E, num_head * hs)

    Wproj = lin(ks[3], E, (E, E))          # torch weight (E, E)
    bproj = lin(ks[4], E, (E,))
    W1 = lin(ks[5], E, (4 * E, E))         # Linear(E, 4E)
    bf1 = lin(ks[6], E, (4 * E,))
    W2 = lin(ks[7], 4 * E, (E, 4 * E))     # Linear(4E, E)
    bf2 = lin(ks[8], 4 * E, (E,))

    bf16 = jnp.bfloat16
    params = {
        # MXU-path weights stored bf16 (half DMA / VMEM, matches MXU peak).
        "wq": combine(Wq).astype(bf16),
        "wkv": jnp.concatenate([combine(Wk), combine(Wv)], axis=1).astype(bf16),
        "wproj": Wproj.T.astype(bf16),
        "w1": W1.T.astype(bf16),
        "w2": W2.T.astype(bf16),
        # Biases / LN params stay f32 (added after f32 accumulation).
        "bproj": bproj.reshape(1, E),
        "bf1": bf1.reshape(1, 4 * E),
        "bf2": bf2.reshape(1, E),
        "g1": jnp.ones((1, E), jnp.float32), "b1": jnp.zeros((1, E), jnp.float32),
        "g2": jnp.ones((1, E), jnp.float32), "b2": jnp.zeros((1, E), jnp.float32),
    }
    return params


def reference(x, params, num_head):
    """Pure-JAX reference of the PyTorch forward (dropout = identity), mirroring
    the kernel's mixed precision (bf16 MXU operands, f32 accumulation)."""
    B, T, E = x.shape
    hs = E // num_head
    bf16 = jnp.bfloat16

    def mm(a, b):
        return jnp.dot(a.astype(bf16), b.astype(bf16),
                       preferred_element_type=jnp.float32)

    def ln(h, g, b):
        mu = h.mean(-1, keepdims=True)
        var = ((h - mu) ** 2).mean(-1, keepdims=True)
        return (h - mu) / jnp.sqrt(var + 1e-5) * g + b

    h1 = ln(x, params["g1"], params["b1"])
    q = mm(h1, params["wq"])
    kv = mm(h1, params["wkv"])
    k, v = kv[..., :E], kv[..., E:]
    mask = jnp.tril(jnp.ones((T, T), bool))
    outs = []
    for h in range(num_head):
        sl = slice(h * hs, (h + 1) * hs)
        qh, kh, vh = q[..., sl], k[..., sl], v[..., sl]
        wei = jnp.einsum('btd,bsd->bts', qh.astype(bf16), kh.astype(bf16),
                         preferred_element_type=jnp.float32) / math.sqrt(hs)
        wei = jnp.where(mask, wei, -jnp.inf)
        wei = jax.nn.softmax(wei, axis=-1)
        outs.append(jnp.einsum('bts,bsd->btd', wei.astype(bf16), vh.astype(bf16),
                               preferred_element_type=jnp.float32))
    att = jnp.concatenate(outs, axis=-1)
    x = x + mm(att, params["wproj"]) + params["bproj"]
    h2 = ln(x, params["g2"], params["b2"])
    ff = jnp.maximum(mm(h2, params["w1"]) + params["bf1"], 0.0)
    ff = mm(ff, params["w2"]) + params["bf2"]
    return x + ff


if __name__ == "__main__":
    B, T, E, NUM_HEAD = 2, 8, 32, 4

    key = jax.random.PRNGKey(0)
    kx, kp = jax.random.split(key)
    x = jax.random.normal(kx, (B, T, E), jnp.float32)
    params = init_params(kp, E, NUM_HEAD)

    out = jax.block_until_ready(attention_block(x, params, NUM_HEAD))
    ref = jax.block_until_ready(reference(x, params, NUM_HEAD))
    np.testing.assert_allclose(np.asarray(out), np.asarray(ref),
                               rtol=1e-2, atol=1e-2)
    print("KERNEL_OK")
</pallas_src>

<mosaic_0001>
module attributes {stable_mosaic.version = 11 : i64} {
  func.func @kernel(%arg0: i32, %arg1: i32, %arg2: memref<1x8x32xf32, #tpu.memory_space<vmem>>, %arg3: memref<1x8x32xf32, #tpu.memory_space<vmem>>, %arg4: memref<32x32xbf16, #tpu.memory_space<vmem>>, %arg5: memref<32x64xbf16, #tpu.memory_space<vmem>>, %arg6: memref<32x32xbf16, #tpu.memory_space<vmem>>, %arg7: memref<1x32xf32, #tpu.memory_space<vmem>>, %arg8: memref<1x32xf32, #tpu.memory_space<vmem>>, %arg9: memref<1x32xf32, #tpu.memory_space<vmem>>, %arg10: memref<1x32xf32, #tpu.memory_space<vmem>>, %arg11: memref<1x32xf32, #tpu.memory_space<vmem>>, %arg12: memref<32x128xbf16, #tpu.memory_space<vmem>>, %arg13: memref<1x128xf32, #tpu.memory_space<vmem>>, %arg14: memref<128x32xbf16, #tpu.memory_space<vmem>>, %arg15: memref<1x32xf32, #tpu.memory_space<vmem>>, %arg16: memref<1x8x32xf32, #tpu.memory_space<vmem>>) attributes {dimension_semantics = [#tpu.dimension_semantics<parallel>, #tpu.dimension_semantics<parallel>], iteration_bounds = array<i64: 2, 1>, scalar_prefetch = 0 : i64, scratch_operands = 0 : i64, tpu.core_type = #tpu.core_type<tc>, window_params = [{transform_indices = @transform_0, window_bounds = array<i64: 1, 8, 32>}, {transform_indices = @transform_1, window_bounds = array<i64: 1, 8, 32>}, {pipeline_mode = #tpu.pipeline_mode<synchronous>, transform_indices = @transform_2, window_bounds = array<i64: 32, 32>}, {pipeline_mode = #tpu.pipeline_mode<synchronous>, transform_indices = @transform_3, window_bounds = array<i64: 32, 64>}, {pipeline_mode = #tpu.pipeline_mode<synchronous>, transform_indices = @transform_4, window_bounds = array<i64: 32, 32>}, {pipeline_mode = #tpu.pipeline_mode<synchronous>, transform_indices = @transform_5, window_bounds = array<i64: 1, 32>}, {pipeline_mode = #tpu.pipeline_mode<synchronous>, transform_indices = @transform_6, window_bounds = array<i64: 1, 32>}, {pipeline_mode = #tpu.pipeline_mode<synchronous>, transform_indices = @transform_7, window_bounds = array<i64: 1, 32>}, {pipeline_mode = #tpu.pipeline_mode<synchronous>, transform_indices = @transform_8, window_bounds = array<i64: 1, 32>}, {pipeline_mode = #tpu.pipeline_mode<synchronous>, transform_indices = @transform_9, window_bounds = array<i64: 1, 32>}, {pipeline_mode = #tpu.pipeline_mode<synchronous>, transform_indices = @transform_10, window_bounds = array<i64: 32, 128>}, {pipeline_mode = #tpu.pipeline_mode<synchronous>, transform_indices = @transform_11, window_bounds = array<i64: 1, 128>}, {pipeline_mode = #tpu.pipeline_mode<synchronous>, transform_indices = @transform_12, window_bounds = array<i64: 128, 32>}, {pipeline_mode = #tpu.pipeline_mode<synchronous>, transform_indices = @transform_13, window_bounds = array<i64: 1, 32>}, {transform_indices = @transform_14, window_bounds = array<i64: 1, 8, 32>}]} {
    %c0 = arith.constant 0 : index
    %c0_0 = arith.constant 0 : index
    %c0_1 = arith.constant 0 : index
    %0 = vector.load %arg2[%c0, %c0_0, %c0_1] : memref<1x8x32xf32, #tpu.memory_space<vmem>>, vector<1x8x32xf32>
    %1 = vector.shape_cast %0 : vector<1x8x32xf32> to vector<8x32xf32>
    %c0_2 = arith.constant 0 : index
    %c0_3 = arith.constant 0 : index
    %c0_4 = arith.constant 0 : index
    %2 = vector.load %arg3[%c0_2, %c0_3, %c0_4] : memref<1x8x32xf32, #tpu.memory_space<vmem>>, vector<1x8x32xf32>
    %3 = vector.shape_cast %2 : vector<1x8x32xf32> to vector<8x32xf32>
    %cst = arith.constant dense<0.000000e+00> : vector<8xf32>
    %4 = vector.multi_reduction <add>, %1, %cst [1] : vector<8x32xf32> to vector<8xf32>
    %5 = vector.shape_cast %4 : vector<8xf32> to vector<8x1xf32>
    %cst_5 = arith.constant 3.200000e+01 : f32
    %6 = vector.broadcast %cst_5 : f32 to vector<8x1xf32>
    %7 = arith.divf %5, %6 : vector<8x1xf32>
    %8 = vector.broadcast %7 : vector<8x1xf32> to vector<8x32xf32>
    %9 = arith.subf %1, %8 : vector<8x32xf32>
    %10 = arith.mulf %9, %9 : vector<8x32xf32>
    %cst_6 = arith.constant dense<0.000000e+00> : vector<8xf32>
    %11 = vector.multi_reduction <add>, %10, %cst_6 [1] : vector<8x32xf32> to vector<8xf32>
    %12 = vector.shape_cast %11 : vector<8xf32> to vector<8x1xf32>
    %cst_7 = arith.constant 3.200000e+01 : f32
    %13 = vector.broadcast %cst_7 : f32 to vector<8x1xf32>
    %14 = arith.divf %12, %13 : vector<8x1xf32>
    %15 = vector.broadcast %7 : vector<8x1xf32> to vector<8x32xf32>
    %16 = arith.subf %1, %15 : vector<8x32xf32>
    %cst_8 = arith.constant 9.99999974E-6 : f32
    %17 = vector.broadcast %cst_8 : f32 to vector<8x1xf32>
    %18 = arith.addf %14, %17 : vector<8x1xf32>
    %19 = math.rsqrt %18 : vector<8x1xf32>
    %20 = vector.broadcast %19 : vector<8x1xf32> to vector<8x32xf32>
    %21 = arith.mulf %16, %20 : vector<8x32xf32>
    %c0_9 = arith.constant 0 : index
    %c0_10 = arith.constant 0 : index
    %22 = vector.load %arg8[%c0_9, %c0_10] : memref<1x32xf32, #tpu.memory_space<vmem>>, vector<1x32xf32>
    %23 = vector.broadcast %22 : vector<1x32xf32> to vector<8x32xf32>
    %24 = arith.mulf %21, %23 : vector<8x32xf32>
    %c0_11 = arith.constant 0 : index
    %c0_12 = arith.constant 0 : index
    %25 = vector.load %arg9[%c0_11, %c0_12] : memref<1x32xf32, #tpu.memory_space<vmem>>, vector<1x32xf32>
    %26 = vector.broadcast %25 : vector<1x32xf32> to vector<8x32xf32>
    %27 = arith.addf %24, %26 : vector<8x32xf32>
    %28 = arith.truncf %27 : vector<8x32xf32> to vector<8x32xbf16>
    %cst_13 = arith.constant dense<0.000000e+00> : vector<8xf32>
    %29 = vector.multi_reduction <add>, %3, %cst_13 [1] : vector<8x32xf32> to vector<8xf32>
    %30 = vector.shape_cast %29 : vector<8xf32> to vector<8x1xf32>
    %cst_14 = arith.constant 3.200000e+01 : f32
    %31 = vector.broadcast %cst_14 : f32 to vector<8x1xf32>
    %32 = arith.divf %30, %31 : vector<8x1xf32>
    %33 = vector.broadcast %32 : vector<8x1xf32> to vector<8x32xf32>
    %34 = arith.subf %3, %33 : vector<8x32xf32>
    %35 = arith.mulf %34, %34 : vector<8x32xf32>
    %cst_15 = arith.constant dense<0.000000e+00> : vector<8xf32>
    %36 = vector.multi_reduction <add>, %35, %cst_15 [1] : vector<8x32xf32> to vector<8xf32>
    %37 = vector.shape_cast %36 : vector<8xf32> to vector<8x1xf32>
    %cst_16 = arith.constant 3.200000e+01 : f32
    %38 = vector.broadcast %cst_16 : f32 to vector<8x1xf32>
    %39 = arith.divf %37, %38 : vector<8x1xf32>
    %40 = vector.broadcast %32 : vector<8x1xf32> to vector<8x32xf32>
    %41 = arith.subf %3, %40 : vector<8x32xf32>
    %cst_17 = arith.constant 9.99999974E-6 : f32
    %42 = vector.broadcast %cst_17 : f32 to vector<8x1xf32>
    %43 = arith.addf %39, %42 : vector<8x1xf32>
    %44 = math.rsqrt %43 : vector<8x1xf32>
    %45 = vector.broadcast %44 : vector<8x1xf32> to vector<8x32xf32>
    %46 = arith.mulf %41, %45 : vector<8x32xf32>
    %c0_18 = arith.constant 0 : index
    %c0_19 = arith.constant 0 : index
    %47 = vector.load %arg8[%c0_18, %c0_19] : memref<1x32xf32, #tpu.memory_space<vmem>>, vector<1x32xf32>
    %48 = vector.broadcast %47 : vector<1x32xf32> to vector<8x32xf32>
    %49 = arith.mulf %46, %48 : vector<8x32xf32>
    %c0_20 = arith.constant 0 : index
    %c0_21 = arith.constant 0 : index
    %50 = vector.load %arg9[%c0_20, %c0_21] : memref<1x32xf32, #tpu.memory_space<vmem>>, vector<1x32xf32>
    %51 = vector.broadcast %50 : vector<1x32xf32> to vector<8x32xf32>
    %52 = arith.addf %49, %51 : vector<8x32xf32>
    %53 = arith.truncf %52 : vector<8x32xf32> to vector<8x32xbf16>
    %c0_22 = arith.constant 0 : index
    %c0_23 = arith.constant 0 : index
    %54 = vector.load %arg4[%c0_22, %c0_23] : memref<32x32xbf16, #tpu.memory_space<vmem>>, vector<32x32xbf16>
    %cst_24 = arith.constant dense<0.000000e+00> : vector<8x32xf32>
    %55 = tpu.matmul %28, %54, %cst_24 {dimension_numbers = #tpu.dot_dimension_numbers<[1], [0], [0], [1], [0, 0, 1, 1], [], []>} : vector<8x32xbf16>, vector<32x32xbf16>, vector<8x32xf32> -> vector<8x32xf32>
    %c0_25 = arith.constant 0 : index
    %c0_26 = arith.constant 0 : index
    %56 = vector.load %arg5[%c0_25, %c0_26] : memref<32x64xbf16, #tpu.memory_space<vmem>>, vector<32x64xbf16>
    %cst_27 = arith.constant dense<0.000000e+00> : vector<8x64xf32>
    %57 = tpu.matmul %53, %56, %cst_27 {dimension_numbers = #tpu.dot_dimension_numbers<[1], [0], [0], [1], [0, 0, 1, 1], [], []>} : vector<8x32xbf16>, vector<32x64xbf16>, vector<8x64xf32> -> vector<8x64xf32>
    %58 = arith.truncf %55 : vector<8x32xf32> to vector<8x32xbf16>
    %59 = vector.extract_strided_slice %57 {offsets = [0, 0], sizes = [8, 32], strides = [1, 1]} : vector<8x64xf32> to vector<8x32xf32>
    %60 = arith.truncf %59 : vector<8x32xf32> to vector<8x32xbf16>
    %61 = vector.extract_strided_slice %57 {offsets = [0, 32], sizes = [8, 32], strides = [1, 1]} : vector<8x64xf32> to vector<8x32xf32>
    %62 = arith.truncf %61 : vector<8x32xf32> to vector<8x32xbf16>
    %c8_i32 = arith.constant 8 : i32
    %63 = arith.muli %arg1, %c8_i32 : i32
    %64 = tpu.iota {dimensions = array<i32: 0>} : vector<8x8xi32>
    %65 = vector.broadcast %63 : i32 to vector<8x8xi32>
    %66 = arith.addi %65, %64 : vector<8x8xi32>
    %67 = tpu.iota {dimensions = array<i32: 1>} : vector<8x8xi32>
    %68 = arith.cmpi sle, %67, %66 : vector<8x8xi32>
    %cst_28 = arith.constant 0.000000e+00 : f32
    %cst_29 = arith.constant 0xFF800000 : f32
    %69 = vector.broadcast %cst_28 : f32 to vector<8x8xf32>
    %70 = vector.broadcast %cst_29 : f32 to vector<8x8xf32>
    %71 = arith.select %68, %69, %70 : vector<8x8xi1>, vector<8x8xf32>
    %72 = vector.extract_strided_slice %58 {offsets = [0, 0], sizes = [8, 8], strides = [1, 1]} : vector<8x32xbf16> to vector<8x8xbf16>
    %73 = vector.extract_strided_slice %60 {offsets = [0, 0], sizes = [8, 8], strides = [1, 1]} : vector<8x32xbf16> to vector<8x8xbf16>
    %74 = vector.extract_strided_slice %62 {offsets = [0, 0], sizes = [8, 8], strides = [1, 1]} : vector<8x32xbf16> to vector<8x8xbf16>
    %cst_30 = arith.constant dense<0.000000e+00> : vector<8x8xf32>
    %75 = tpu.matmul %72, %73, %cst_30 {dimension_numbers = #tpu.dot_dimension_numbers<[1], [1], [0], [0], [0, 0, 1, 0], [], []>} : vector<8x8xbf16>, vector<8x8xbf16>, vector<8x8xf32> -> vector<8x8xf32>
    %cst_31 = arith.constant 0.353553385 : f32
    %76 = vector.broadcast %cst_31 : f32 to vector<8x8xf32>
    %77 = arith.mulf %75, %76 : vector<8x8xf32>
    %78 = arith.addf %77, %71 : vector<8x8xf32>
    %cst_32 = arith.constant dense<0xFF800000> : vector<8xf32>
    %79 = vector.multi_reduction <maximumf>, %78, %cst_32 [1] : vector<8x8xf32> to vector<8xf32>
    %80 = vector.shape_cast %79 : vector<8xf32> to vector<8x1xf32>
    %81 = vector.broadcast %80 : vector<8x1xf32> to vector<8x8xf32>
    %82 = arith.subf %78, %81 : vector<8x8xf32>
    %83 = math.exp %82 : vector<8x8xf32>
    %cst_33 = arith.constant dense<0.000000e+00> : vector<8xf32>
    %84 = vector.multi_reduction <add>, %83, %cst_33 [1] : vector<8x8xf32> to vector<8xf32>
    %85 = vector.shape_cast %84 : vector<8xf32> to vector<8x1xf32>
    %86 = arith.truncf %83 : vector<8x8xf32> to vector<8x8xbf16>
    %cst_34 = arith.constant dense<0.000000e+00> : vector<8x8xf32>
    %87 = tpu.matmul %86, %74, %cst_34 {dimension_numbers = #tpu.dot_dimension_numbers<[1], [0], [0], [1], [0, 0, 1, 1], [], []>} : vector<8x8xbf16>, vector<8x8xbf16>, vector<8x8xf32> -> vector<8x8xf32>
    %88 = tpu.reciprocal %85 {approx = true} : vector<8x1xf32> -> vector<8x1xf32>
    %89 = vector.broadcast %88 : vector<8x1xf32> to vector<8x8xf32>
    %90 = arith.mulf %87, %89 : vector<8x8xf32>
    %91 = vector.extract_strided_slice %58 {offsets = [0, 8], sizes = [8, 8], strides = [1, 1]} : vector<8x32xbf16> to vector<8x8xbf16>
    %92 = vector.extract_strided_slice %60 {offsets = [0, 8], sizes = [8, 8], strides = [1, 1]} : vector<8x32xbf16> to vector<8x8xbf16>
    %93 = vector.extract_strided_slice %62 {offsets = [0, 8], sizes = [8, 8], strides = [1, 1]} : vector<8x32xbf16> to vector<8x8xbf16>
    %cst_35 = arith.constant dense<0.000000e+00> : vector<8x8xf32>
    %94 = tpu.matmul %91, %92, %cst_35 {dimension_numbers = #tpu.dot_dimension_numbers<[1], [1], [0], [0], [0, 0, 1, 0], [], []>} : vector<8x8xbf16>, vector<8x8xbf16>, vector<8x8xf32> -> vector<8x8xf32>
    %cst_36 = arith.constant 0.353553385 : f32
    %95 = vector.broadcast %cst_36 : f32 to vector<8x8xf32>
    %96 = arith.mulf %94, %95 : vector<8x8xf32>
    %97 = arith.addf %96, %71 : vector<8x8xf32>
    %cst_37 = arith.constant dense<0xFF800000> : vector<8xf32>
    %98 = vector.multi_reduction <maximumf>, %97, %cst_37 [1] : vector<8x8xf32> to vector<8xf32>
    %99 = vector.shape_cast %98 : vector<8xf32> to vector<8x1xf32>
    %100 = vector.broadcast %99 : vector<8x1xf32> to vector<8x8xf32>
    %101 = arith.subf %97, %100 : vector<8x8xf32>
    %102 = math.exp %101 : vector<8x8xf32>
    %cst_38 = arith.constant dense<0.000000e+00> : vector<8xf32>
    %103 = vector.multi_reduction <add>, %102, %cst_38 [1] : vector<8x8xf32> to vector<8xf32>
    %104 = vector.shape_cast %103 : vector<8xf32> to vector<8x1xf32>
    %105 = arith.truncf %102 : vector<8x8xf32> to vector<8x8xbf16>
    %cst_39 = arith.constant dense<0.000000e+00> : vector<8x8xf32>
    %106 = tpu.matmul %105, %93, %cst_39 {dimension_numbers = #tpu.dot_dimension_numbers<[1], [0], [0], [1], [0, 0, 1, 1], [], []>} : vector<8x8xbf16>, vector<8x8xbf16>, vector<8x8xf32> -> vector<8x8xf32>
    %107 = tpu.reciprocal %104 {approx = true} : vector<8x1xf32> -> vector<8x1xf32>
    %108 = vector.broadcast %107 : vector<8x1xf32> to vector<8x8xf32>
    %109 = arith.mulf %106, %108 : vector<8x8xf32>
    %110 = vector.extract_strided_slice %58 {offsets = [0, 16], sizes = [8, 8], strides = [1, 1]} : vector<8x32xbf16> to vector<8x8xbf16>
    %111 = vector.extract_strided_slice %60 {offsets = [0, 16], sizes = [8, 8], strides = [1, 1]} : vector<8x32xbf16> to vector<8x8xbf16>
    %112 = vector.extract_strided_slice %62 {offsets = [0, 16], sizes = [8, 8], strides = [1, 1]} : vector<8x32xbf16> to vector<8x8xbf16>
    %cst_40 = arith.constant dense<0.000000e+00> : vector<8x8xf32>
    %113 = tpu.matmul %110, %111, %cst_40 {dimension_numbers = #tpu.dot_dimension_numbers<[1], [1], [0], [0], [0, 0, 1, 0], [], []>} : vector<8x8xbf16>, vector<8x8xbf16>, vector<8x8xf32> -> vector<8x8xf32>
    %cst_41 = arith.constant 0.353553385 : f32
    %114 = vector.broadcast %cst_41 : f32 to vector<8x8xf32>
    %115 = arith.mulf %113, %114 : vector<8x8xf32>
    %116 = arith.addf %115, %71 : vector<8x8xf32>
    %cst_42 = arith.constant dense<0xFF800000> : vector<8xf32>
    %117 = vector.multi_reduction <maximumf>, %116, %cst_42 [1] : vector<8x8xf32> to vector<8xf32>
    %118 = vector.shape_cast %117 : vector<8xf32> to vector<8x1xf32>
    %119 = vector.broadcast %118 : vector<8x1xf32> to vector<8x8xf32>
    %120 = arith.subf %116, %119 : vector<8x8xf32>
    %121 = math.exp %120 : vector<8x8xf32>
    %cst_43 = arith.constant dense<0.000000e+00> : vector<8xf32>
    %122 = vector.multi_reduction <add>, %121, %cst_43 [1] : vector<8x8xf32> to vector<8xf32>
    %123 = vector.shape_cast %122 : vector<8xf32> to vector<8x1xf32>
    %124 = arith.truncf %121 : vector<8x8xf32> to vector<8x8xbf16>
    %cst_44 = arith.constant dense<0.000000e+00> : vector<8x8xf32>
    %125 = tpu.matmul %124, %112, %cst_44 {dimension_numbers = #tpu.dot_dimension_numbers<[1], [0], [0], [1], [0, 0, 1, 1], [], []>} : vector<8x8xbf16>, vector<8x8xbf16>, vector<8x8xf32> -> vector<8x8xf32>
    %126 = tpu.reciprocal %123 {approx = true} : vector<8x1xf32> -> vector<8x1xf32>
    %127 = vector.broadcast %126 : vector<8x1xf32> to vector<8x8xf32>
    %128 = arith.mulf %125, %127 : vector<8x8xf32>
    %129 = vector.extract_strided_slice %58 {offsets = [0, 24], sizes = [8, 8], strides = [1, 1]} : vector<8x32xbf16> to vector<8x8xbf16>
    %130 = vector.extract_strided_slice %60 {offsets = [0, 24], sizes = [8, 8], strides = [1, 1]} : vector<8x32xbf16> to vector<8x8xbf16>
    %131 = vector.extract_strided_slice %62 {offsets = [0, 24], sizes = [8, 8], strides = [1, 1]} : vector<8x32xbf16> to vector<8x8xbf16>
    %cst_45 = arith.constant dense<0.000000e+00> : vector<8x8xf32>
    %132 = tpu.matmul %129, %130, %cst_45 {dimension_numbers = #tpu.dot_dimension_numbers<[1], [1], [0], [0], [0, 0, 1, 0], [], []>} : vector<8x8xbf16>, vector<8x8xbf16>, vector<8x8xf32> -> vector<8x8xf32>
    %cst_46 = arith.constant 0.353553385 : f32
    %133 = vector.broadcast %cst_46 : f32 to vector<8x8xf32>
    %134 = arith.mulf %132, %133 : vector<8x8xf32>
    %135 = arith.addf %134, %71 : vector<8x8xf32>
    %cst_47 = arith.constant dense<0xFF800000> : vector<8xf32>
    %136 = vector.multi_reduction <maximumf>, %135, %cst_47 [1] : vector<8x8xf32> to vector<8xf32>
    %137 = vector.shape_cast %136 : vector<8xf32> to vector<8x1xf32>
    %138 = vector.broadcast %137 : vector<8x1xf32> to vector<8x8xf32>
    %139 = arith.subf %135, %138 : vector<8x8xf32>
    %140 = math.exp %139 : vector<8x8xf32>
    %cst_48 = arith.constant dense<0.000000e+00> : vector<8xf32>
    %141 = vector.multi_reduction <add>, %140, %cst_48 [1] : vector<8x8xf32> to vector<8xf32>
    %142 = vector.shape_cast %141 : vector<8xf32> to vector<8x1xf32>
    %143 = arith.truncf %140 : vector<8x8xf32> to vector<8x8xbf16>
    %cst_49 = arith.constant dense<0.000000e+00> : vector<8x8xf32>
    %144 = tpu.matmul %143, %131, %cst_49 {dimension_numbers = #tpu.dot_dimension_numbers<[1], [0], [0], [1], [0, 0, 1, 1], [], []>} : vector<8x8xbf16>, vector<8x8xbf16>, vector<8x8xf32> -> vector<8x8xf32>
    %145 = tpu.reciprocal %142 {approx = true} : vector<8x1xf32> -> vector<8x1xf32>
    %146 = vector.broadcast %145 : vector<8x1xf32> to vector<8x8xf32>
    %147 = arith.mulf %144, %146 : vector<8x8xf32>
    %148 = tpu.concatenate %90, %109, %128, %147 in 1 : vector<8x8xf32>, vector<8x8xf32>, vector<8x8xf32>, vector<8x8xf32> -> vector<8x32xf32>
    %149 = arith.truncf %148 : vector<8x32xf32> to vector<8x32xbf16>
    %c0_50 = arith.constant 0 : index
    %c0_51 = arith.constant 0 : index
    %150 = vector.load %arg6[%c0_50, %c0_51] : memref<32x32xbf16, #tpu.memory_space<vmem>>, vector<32x32xbf16>
    %cst_52 = arith.constant dense<0.000000e+00> : vector<8x32xf32>
    %151 = tpu.matmul %149, %150, %cst_52 {dimension_numbers = #tpu.dot_dimension_numbers<[1], [0], [0], [1], [0, 0, 1, 1], [], []>} : vector<8x32xbf16>, vector<32x32xbf16>, vector<8x32xf32> -> vector<8x32xf32>
    %c0_53 = arith.constant 0 : index
    %c0_54 = arith.constant 0 : index
    %152 = vector.load %arg7[%c0_53, %c0_54] : memref<1x32xf32, #tpu.memory_space<vmem>>, vector<1x32xf32>
    %153 = vector.broadcast %152 : vector<1x32xf32> to vector<8x32xf32>
    %154 = arith.addf %151, %153 : vector<8x32xf32>
    %155 = arith.addf %1, %154 : vector<8x32xf32>
    %cst_55 = arith.constant dense<0.000000e+00> : vector<8xf32>
    %156 = vector.multi_reduction <add>, %155, %cst_55 [1] : vector<8x32xf32> to vector<8xf32>
    %157 = vector.shape_cast %156 : vector<8xf32> to vector<8x1xf32>
    %cst_56 = arith.constant 3.200000e+01 : f32
    %158 = vector.broadcast %cst_56 : f32 to vector<8x1xf32>
    %159 = arith.divf %157, %158 : vector<8x1xf32>
    %160 = vector.broadcast %159 : vector<8x1xf32> to vector<8x32xf32>
    %161 = arith.subf %155, %160 : vector<8x32xf32>
    %162 = arith.mulf %161, %161 : vector<8x32xf32>
    %cst_57 = arith.constant dense<0.000000e+00> : vector<8xf32>
    %163 = vector.multi_reduction <add>, %162, %cst_57 [1] : vector<8x32xf32> to vector<8xf32>
    %164 = vector.shape_cast %163 : vector<8xf32> to vector<8x1xf32>
    %cst_58 = arith.constant 3.200000e+01 : f32
    %165 = vector.broadcast %cst_58 : f32 to vector<8x1xf32>
    %166 = arith.divf %164, %165 : vector<8x1xf32>
    %167 = vector.broadcast %159 : vector<8x1xf32> to vector<8x32xf32>
    %168 = arith.subf %155, %167 : vector<8x32xf32>
    %cst_59 = arith.constant 9.99999974E-6 : f32
    %169 = vector.broadcast %cst_59 : f32 to vector<8x1xf32>
    %170 = arith.addf %166, %169 : vector<8x1xf32>
    %171 = math.rsqrt %170 : vector<8x1xf32>
    %172 = vector.broadcast %171 : vector<8x1xf32> to vector<8x32xf32>
    %173 = arith.mulf %168, %172 : vector<8x32xf32>
    %c0_60 = arith.constant 0 : index
    %c0_61 = arith.constant 0 : index
    %174 = vector.load %arg10[%c0_60, %c0_61] : memref<1x32xf32, #tpu.memory_space<vmem>>, vector<1x32xf32>
    %175 = vector.broadcast %174 : vector<1x32xf32> to vector<8x32xf32>
    %176 = arith.mulf %173, %175 : vector<8x32xf32>
    %c0_62 = arith.constant 0 : index
    %c0_63 = arith.constant 0 : index
    %177 = vector.load %arg11[%c0_62, %c0_63] : memref<1x32xf32, #tpu.memory_space<vmem>>, vector<1x32xf32>
    %178 = vector.broadcast %177 : vector<1x32xf32> to vector<8x32xf32>
    %179 = arith.addf %176, %178 : vector<8x32xf32>
    %180 = arith.truncf %179 : vector<8x32xf32> to vector<8x32xbf16>
    %c0_64 = arith.constant 0 : index
    %c0_65 = arith.constant 0 : index
    %181 = vector.load %arg12[%c0_64, %c0_65] : memref<32x128xbf16, #tpu.memory_space<vmem>>, vector<32x128xbf16>
    %cst_66 = arith.constant dense<0.000000e+00> : vector<8x128xf32>
    %182 = tpu.matmul %180, %181, %cst_66 {dimension_numbers = #tpu.dot_dimension_numbers<[1], [0], [0], [1], [0, 0, 1, 1], [], []>} : vector<8x32xbf16>, vector<32x128xbf16>, vector<8x128xf32> -> vector<8x128xf32>
    %c0_67 = arith.constant 0 : index
    %c0_68 = arith.constant 0 : index
    %183 = vector.load %arg13[%c0_67, %c0_68] : memref<1x128xf32, #tpu.memory_space<vmem>>, vector<1x128xf32>
    %184 = vector.broadcast %183 : vector<1x128xf32> to vector<8x128xf32>
    %185 = arith.addf %182, %184 : vector<8x128xf32>
    %cst_69 = arith.constant 0.000000e+00 : f32
    %186 = vector.broadcast %cst_69 : f32 to vector<8x128xf32>
    %187 = arith.maximumf %185, %186 : vector<8x128xf32>
    %188 = arith.truncf %187 : vector<8x128xf32> to vector<8x128xbf16>
    %c0_70 = arith.constant 0 : index
    %c0_71 = arith.constant 0 : index
    %189 = vector.load %arg14[%c0_70, %c0_71] : memref<128x32xbf16, #tpu.memory_space<vmem>>, vector<128x32xbf16>
    %cst_72 = arith.constant dense<0.000000e+00> : vector<8x32xf32>
    %190 = tpu.matmul %188, %189, %cst_72 {dimension_numbers = #tpu.dot_dimension_numbers<[1], [0], [0], [1], [0, 0, 1, 1], [], []>} : vector<8x128xbf16>, vector<128x32xbf16>, vector<8x32xf32> -> vector<8x32xf32>
    %c0_73 = arith.constant 0 : index
    %c0_74 = arith.constant 0 : index
    %191 = vector.load %arg15[%c0_73, %c0_74] : memref<1x32xf32, #tpu.memory_space<vmem>>, vector<1x32xf32>
    %192 = vector.broadcast %191 : vector<1x32xf32> to vector<8x32xf32>
    %193 = arith.addf %190, %192 : vector<8x32xf32>
    %194 = arith.addf %155, %193 : vector<8x32xf32>
    %c0_75 = arith.constant 0 : index
    %c0_76 = arith.constant 0 : index
    %c0_77 = arith.constant 0 : index
    %195 = vector.load %arg16[%c0_75, %c0_76, %c0_77] : memref<1x8x32xf32, #tpu.memory_space<vmem>>, vector<1x8x32xf32>
    %196 = vector.shape_cast %195 : vector<1x8x32xf32> to vector<8x32xf32>
    %197 = vector.shape_cast %194 : vector<8x32xf32> to vector<1x8x32xf32>
    tpu.vector_store %arg16[%c0_75, %c0_76, %c0_77], %197 {strides = array<i32>} : memref<1x8x32xf32, #tpu.memory_space<vmem>>, vector<1x8x32xf32>,
    return
  }
  func.func @transform_0(%arg0: i32, %arg1: i32) -> (i32, i32, i32) {
    %c0_i32 = arith.constant 0 : i32
    %c0_i32_0 = arith.constant 0 : i32
    return %arg0, %arg1, %c0_i32 : i32, i32, i32
  }
  func.func @transform_1(%arg0: i32, %arg1: i32) -> (i32, i32, i32) {
    %c0_i32 = arith.constant 0 : i32
    %c0_i32_0 = arith.constant 0 : i32
    %c0_i32_1 = arith.constant 0 : i32
    return %arg0, %c0_i32, %c0_i32_0 : i32, i32, i32
  }
  func.func @transform_2(%arg0: i32, %arg1: i32) -> (i32, i32) {
    %c0_i32 = arith.constant 0 : i32
    %c0_i32_0 = arith.constant 0 : i32
    %c0_i32_1 = arith.constant 0 : i32
    return %c0_i32, %c0_i32_0 : i32, i32
  }
  func.func @transform_3(%arg0: i32, %arg1: i32) -> (i32, i32) {
    %c0_i32 = arith.constant 0 : i32
    %c0_i32_0 = arith.constant 0 : i32
    %c0_i32_1 = arith.constant 0 : i32
    return %c0_i32, %c0_i32_0 : i32, i32
  }
  func.func @transform_4(%arg0: i32, %arg1: i32) -> (i32, i32) {
    %c0_i32 = arith.constant 0 : i32
    %c0_i32_0 = arith.constant 0 : i32
    %c0_i32_1 = arith.constant 0 : i32
    return %c0_i32, %c0_i32_0 : i32, i32
  }
  func.func @transform_5(%arg0: i32, %arg1: i32) -> (i32, i32) {
    %c0_i32 = arith.constant 0 : i32
    %c0_i32_0 = arith.constant 0 : i32
    %c0_i32_1 = arith.constant 0 : i32
    return %c0_i32, %c0_i32_0 : i32, i32
  }
  func.func @transform_6(%arg0: i32, %arg1: i32) -> (i32, i32) {
    %c0_i32 = arith.constant 0 : i32
    %c0_i32_0 = arith.constant 0 : i32
    %c0_i32_1 = arith.constant 0 : i32
    return %c0_i32, %c0_i32_0 : i32, i32
  }
  func.func @transform_7(%arg0: i32, %arg1: i32) -> (i32, i32) {
    %c0_i32 = arith.constant 0 : i32
    %c0_i32_0 = arith.constant 0 : i32
    %c0_i32_1 = arith.constant 0 : i32
    return %c0_i32, %c0_i32_0 : i32, i32
  }
  func.func @transform_8(%arg0: i32, %arg1: i32) -> (i32, i32) {
    %c0_i32 = arith.constant 0 : i32
    %c0_i32_0 = arith.constant 0 : i32
    %c0_i32_1 = arith.constant 0 : i32
    return %c0_i32, %c0_i32_0 : i32, i32
  }
  func.func @transform_9(%arg0: i32, %arg1: i32) -> (i32, i32) {
    %c0_i32 = arith.constant 0 : i32
    %c0_i32_0 = arith.constant 0 : i32
    %c0_i32_1 = arith.constant 0 : i32
    return %c0_i32, %c0_i32_0 : i32, i32
  }
  func.func @transform_10(%arg0: i32, %arg1: i32) -> (i32, i32) {
    %c0_i32 = arith.constant 0 : i32
    %c0_i32_0 = arith.constant 0 : i32
    %c0_i32_1 = arith.constant 0 : i32
    return %c0_i32, %c0_i32_0 : i32, i32
  }
  func.func @transform_11(%arg0: i32, %arg1: i32) -> (i32, i32) {
    %c0_i32 = arith.constant 0 : i32
    %c0_i32_0 = arith.constant 0 : i32
    %c0_i32_1 = arith.constant 0 : i32
    return %c0_i32, %c0_i32_0 : i32, i32
  }
  func.func @transform_12(%arg0: i32, %arg1: i32) -> (i32, i32) {
    %c0_i32 = arith.constant 0 : i32
    %c0_i32_0 = arith.constant 0 : i32
    %c0_i32_1 = arith.constant 0 : i32
    return %c0_i32, %c0_i32_0 : i32, i32
  }
  func.func @transform_13(%arg0: i32, %arg1: i32) -> (i32, i32) {
    %c0_i32 = arith.constant 0 : i32
    %c0_i32_0 = arith.constant 0 : i32
    %c0_i32_1 = arith.constant 0 : i32
    return %c0_i32, %c0_i32_0 : i32, i32
  }
  func.func @transform_14(%arg0: i32, %arg1: i32) -> (i32, i32, i32) {
    %c0_i32 = arith.constant 0 : i32
    %c0_i32_0 = arith.constant 0 : i32
    return %arg0, %arg1, %c0_i32 : i32, i32, i32
  }
}

</mosaic_0001>

<llo_original>
// kernel: tpu_custom_call.1
$region0: #{tpu_custom_call.1}
  #allocation0 [shape = 'u32[]', space=smem, size = 0x4, offset = 0x4, fixed_abs, tag = 'smem constant byte address 0x4 - core index']
  #allocation1 [shape = 'u32[144,128]{1,0:T(1,128)}', space=vmem, size = 0x12000, scoped, tag = 'internal scratch']
  %s0 = inlined_call_operand.vmem [shape: f32[2,8,32], index: 0, kind: input, shape index: {}]
  %s1 = inlined_call_operand.vmem [shape: f32[2,8,32], index: 1, kind: input, shape index: {}]
  %s2 = inlined_call_operand.vmem [shape: bf16[32,32], index: 2, kind: input, shape index: {}]
  %s3 = inlined_call_operand.vmem [shape: bf16[32,64], index: 3, kind: input, shape index: {}]
  %s4 = inlined_call_operand.vmem [shape: bf16[32,32], index: 4, kind: input, shape index: {}]
  %s5 = inlined_call_operand.vmem [shape: f32[1,32], index: 5, kind: input, shape index: {}]
  %s6 = inlined_call_operand.vmem [shape: f32[1,32], index: 6, kind: input, shape index: {}]
  %s7 = inlined_call_operand.hbm [shape: f32[1,32], index: 7, kind: input, shape index: {}]
  %s8 = inlined_call_operand.hbm [shape: f32[1,32], index: 8, kind: input, shape index: {}]
  %s9 = inlined_call_operand.hbm [shape: f32[1,32], index: 9, kind: input, shape index: {}]
  %s10 = inlined_call_operand.vmem [shape: bf16[32,128], index: 10, kind: input, shape index: {}]
  %s11 = inlined_call_operand.vmem [shape: f32[1,128], index: 11, kind: input, shape index: {}]
  %s12 = inlined_call_operand.vmem [shape: bf16[128,32], index: 12, kind: input, shape index: {}]
  %s13 = inlined_call_operand.vmem [shape: f32[1,32], index: 13, kind: input, shape index: {}]
  %s14 = inlined_call_operand.hbm [shape: f32[2,8,32], index: 14, kind: output, shape index: {}]
  %s15 = sld [smem:[#allocation0]]
  $region101: #{tpu_custom_call.1} parent=0
    _
  %s17 = ssub.s32 1, %s15
  %s18 = scalar_select 0, %s17, %s15
  $region1: #{tpu_custom_call.1} parent=0
    #allocation2 [shape = 'u8[512]{0}', space=vmem, size = 0x400, scoped, tag = 'input window, operand 7, single buffered']
    #allocation3 [shape = 's32[2]{0}', space=sflag, size = 0x8, scoped, tag = 'scoped memory for tpu_custom_call.1']
    #allocation4 [shape = 's32[2]{0}', space=sflag, size = 0x8, scoped, tag = 'scoped memory for tpu_custom_call.1']
    #allocation5 [shape = 'u8[512]{0}', space=vmem, size = 0x400, scoped, tag = 'input window, operand 8, single buffered']
    #allocation6 [shape = 's32[1]{0}', space=sflag, size = 0x4, scoped, tag = 'scoped memory for tpu_custom_call.1']
    #allocation7 [shape = 'u8[512]{0}', space=vmem, size = 0x400, scoped, tag = 'input window, operand 9, single buffered']
    #allocation8 [shape = 'u8[8192]{0}', space=vmem, size = 0x2000, scoped, tag = 'output window, operand 0']
    %19 = vsyncpa [#allocation3], 0
    %20 = vsyncpa [#allocation6], 0
    %21 = vsyncpa [#allocation4], 0
    %s22 = scalar_lea.sflag [#allocation4], 1
    %23 = vsyncpa %s22, 0
    loop: start=0, step=1, limit=4
    $region2: #{tpu_custom_call.1} parent=1 // loop_pre_header
      _
    $region3: #{tpu_custom_call.1} parent=1 // loop_header
      %s25 = sphi 0, %s29
      %p26 = scmp.ge.s32.totalorder %s25, 4
      %s32 = sphi 0, %s44
      %s33 = sphi 0, %s40
      %s34 = sphi 0, %s32
      %s35 = sphi 0, %s33
      %s36 = sphi 0, %s34
      %s37 = sphi 0, %s35
      %s49 = sphi 0, %s51
      %s52 = sphi 0, %s49
      %s53 = sphi 0, %s52
      %s69 = sphi 0, %s53
      %s75 = sphi 0, %s77
      %s78 = sphi 0, %s75
      %s79 = sphi 0, %s78
      %s95 = sphi 0, %s79
      %s99 = sphi 0, %s99
      %s101 = sphi 0, %s99
      %s102 = sphi 0, %s101
      %s116 = sphi 0, %s102
      %s120 = sphi 0, %s120
      %s122 = sphi 0, %s120
      %s123 = sphi 0, %s122
      %s137 = sphi 0, %s123
      %s141 = sphi 0, %s141
      %s143 = sphi 0, %s141
      %s144 = sphi 0, %s143
      %s158 = sphi 0, %s144
      %s162 = sphi 0, %s162
      %s164 = sphi 0, %s162
      %s165 = sphi 0, %s164
      %s179 = sphi 0, %s165
      %s183 = sphi 0, %s183
      %s185 = sphi 0, %s183
      %s186 = sphi 0, %s185
      %s200 = sphi 0, %s186
      %s204 = sphi 0, %s204
      %s206 = sphi 0, %s204
      %s207 = sphi 0, %s206
      %s221 = sphi 0, %s207
      %s225 = sphi 0, %s225
      %s227 = sphi 0, %s225
      %s228 = sphi 0, %s227
      %s242 = sphi 0, %s228
      %s246 = sphi 0, %s246
      %s248 = sphi 0, %s246
      %s249 = sphi 0, %s248
      %s263 = sphi 0, %s249
      %s267 = sphi 0, %s267
      %s269 = sphi 0, %s267
      %s270 = sphi 0, %s269
      %s284 = sphi 0, %s270
      %s288 = sphi 0, %s288
      %s290 = sphi 0, %s288
      %s291 = sphi 0, %s290
      %s305 = sphi 0, %s291
      %s309 = sphi 0, %s309
      %s311 = sphi 0, %s309
      %s312 = sphi 0, %s311
      %s326 = sphi 0, %s312
      %s330 = sphi 0, %s330
      %s332 = sphi 0, %s330
      %s333 = sphi 0, %s332
      %s347 = sphi 0, %s333
      %s355 = sphi 0, %s357
      %s358 = sphi 0, %s355
      %s359 = sphi 0, %s358
      %s375 = sphi 0, %s359
    $region4: #{tpu_custom_call.1} parent=1 // loop_header_branch
      %28 = sbr.rel (%p26) target = $region8
    $region5: #{tpu_custom_call.1} parent=1 // loop_body
      %s30 = ssub.s32 %s25, 1
      %s31 = ssub.s32 %s25, 2
      %s38 = sadd.s32 1, %s33
      %p39 = scmp.ge.s32.totalorder %s38, 1
      %s40 = scalar_select %p39, 0, %s38
      %s41 = sadd.s32 1, %s32
      %s42 = scalar_select %p39, %s41, %s32
      %p43 = scmp.ge.s32.totalorder %s42, 2
      %s44 = scalar_select %p43, 0, %s42
      %s45 = ssub.s32 %s32, %s44
      %s46 = ssub.s32 %s33, %s40
      %s47 = sor.u32 %s45, %s46
      %p48 = scmp.eq.s32.totalorder %s47, 0
      %s50 = sadd.s32 %s49, 1
      %s51 = scalar_select %p48, %s49, %s50
      %p54 = pneg %p48
      %p55 = scmp.eq.s32.totalorder %s25, 1
      %p56 = por %p54, %p55
      %p57 = scmp.ne.s32.totalorder %s49, %s52
      %p58 = scmp.eq.s32.totalorder %s25, 0
      %p59 = por %p57, %p58
      %p60 = scmp.ne.s32.totalorder %s49, %s52
      %p61 = scmp.eq.s32.totalorder %s30, 1
      %p62 = por %p60, %p61
      %p63 = scmp.ne.s32.totalorder %s52, %s53
      %p64 = scmp.eq.s32.totalorder %s30, 0
      %p65 = por %p63, %p64
      %p66 = scmp.ne.s32.totalorder %s52, %s53
      %p67 = scmp.eq.s32.totalorder %s31, 1
      %p68 = por %p66, %p67
      %p70 = scmp.ne.s32.totalorder %s53, %s69
      %p71 = scmp.eq.s32.totalorder %s31, 0
      %p72 = por %p70, %p71
      %s73 = ssub.s32 %s32, %s44
      %p74 = scmp.eq.s32.totalorder %s73, 0
      %s76 = sadd.s32 %s75, 1
      %s77 = scalar_select %p74, %s75, %s76
      %p80 = pneg %p74
      %p81 = scmp.eq.s32.totalorder %s25, 1
      %p82 = por %p80, %p81
      %p83 = scmp.ne.s32.totalorder %s75, %s78
      %p84 = scmp.eq.s32.totalorder %s25, 0
      %p85 = por %p83, %p84
      %p86 = scmp.ne.s32.totalorder %s75, %s78
      %p87 = scmp.eq.s32.totalorder %s30, 1
      %p88 = por %p86, %p87
      %p89 = scmp.ne.s32.totalorder %s78, %s79
      %p90 = scmp.eq.s32.totalorder %s30, 0
      %p91 = por %p89, %p90
      %p92 = scmp.ne.s32.totalorder %s78, %s79
      %p93 = scmp.eq.s32.totalorder %s31, 1
      %p94 = por %p92, %p93
      %p96 = scmp.ne.s32.totalorder %s79, %s95
      %p97 = scmp.eq.s32.totalorder %s31, 0
      %p98 = por %p96, %p97
      %s100 = sadd.s32 %s99, 1
      %p103 = scmp.eq.s32.totalorder %s25, 1
      %p104 = scmp.ne.s32.totalorder %s99, %s101
      %p105 = scmp.eq.s32.totalorder %s25, 0
      %p106 = por %p104, %p105
      %p107 = scmp.ne.s32.totalorder %s99, %s101
      %p108 = scmp.eq.s32.totalorder %s30, 1
      %p109 = por %p107, %p108
      %p110 = scmp.ne.s32.totalorder %s101, %s102
      %p111 = scmp.eq.s32.totalorder %s30, 0
      %p112 = por %p110, %p111
      %p113 = scmp.ne.s32.totalorder %s101, %s102
      %p114 = scmp.eq.s32.totalorder %s31, 1
      %p115 = por %p113, %p114
      %p117 = scmp.ne.s32.totalorder %s102, %s116
      %p118 = scmp.eq.s32.totalorder %s31, 0
      %p119 = por %p117, %p118
      %s121 = sadd.s32 %s120, 1
      %p124 = scmp.eq.s32.totalorder %s25, 1
      %p125 = scmp.ne.s32.totalorder %s120, %s122
      %p126 = scmp.eq.s32.totalorder %s25, 0
      %p127 = por %p125, %p126
      %p128 = scmp.ne.s32.totalorder %s120, %s122
      %p129 = scmp.eq.s32.totalorder %s30, 1
      %p130 = por %p128, %p129
      %p131 = scmp.ne.s32.totalorder %s122, %s123
      %p132 = scmp.eq.s32.totalorder %s30, 0
      %p133 = por %p131, %p132
      %p134 = scmp.ne.s32.totalorder %s122, %s123
      %p135 = scmp.eq.s32.totalorder %s31, 1
      %p136 = por %p134, %p135
      %p138 = scmp.ne.s32.totalorder %s123, %s137
      %p139 = scmp.eq.s32.totalorder %s31, 0
      %p140 = por %p138, %p139
      %s142 = sadd.s32 %s141, 1
      %p145 = scmp.eq.s32.totalorder %s25, 1
      %p146 = scmp.ne.s32.totalorder %s141, %s143
      %p147 = scmp.eq.s32.totalorder %s25, 0
      %p148 = por %p146, %p147
      %p149 = scmp.ne.s32.totalorder %s141, %s143
      %p150 = scmp.eq.s32.totalorder %s30, 1
      %p151 = por %p149, %p150
      %p152 = scmp.ne.s32.totalorder %s143, %s144
      %p153 = scmp.eq.s32.totalorder %s30, 0
      %p154 = por %p152, %p153
      %p155 = scmp.ne.s32.totalorder %s143, %s144
      %p156 = scmp.eq.s32.totalorder %s31, 1
      %p157 = por %p155, %p156
      %p159 = scmp.ne.s32.totalorder %s144, %s158
      %p160 = scmp.eq.s32.totalorder %s31, 0
      %p161 = por %p159, %p160
      %s163 = sadd.s32 %s162, 1
      %p166 = scmp.eq.s32.totalorder %s25, 1
      %p167 = scmp.ne.s32.totalorder %s162, %s164
      %p168 = scmp.eq.s32.totalorder %s25, 0
      %p169 = por %p167, %p168
      %p170 = scmp.ne.s32.totalorder %s162, %s164
      %p171 = scmp.eq.s32.totalorder %s30, 1
      %p172 = por %p170, %p171
      %p173 = scmp.ne.s32.totalorder %s164, %s165
      %p174 = scmp.eq.s32.totalorder %s30, 0
      %p175 = por %p173, %p174
      %p176 = scmp.ne.s32.totalorder %s164, %s165
      %p177 = scmp.eq.s32.totalorder %s31, 1
      %p178 = por %p176, %p177
      %p180 = scmp.ne.s32.totalorder %s165, %s179
      %p181 = scmp.eq.s32.totalorder %s31, 0
      %p182 = por %p180, %p181
      %s184 = sadd.s32 %s183, 1
      %p187 = scmp.eq.s32.totalorder %s25, 1
      %p188 = scmp.ne.s32.totalorder %s183, %s185
      %p189 = scmp.eq.s32.totalorder %s25, 0
      %p190 = por %p188, %p189
      %p191 = scmp.ne.s32.totalorder %s183, %s185
      %p192 = scmp.eq.s32.totalorder %s30, 1
      %p193 = por %p191, %p192
      %p194 = scmp.ne.s32.totalorder %s185, %s186
      %p195 = scmp.eq.s32.totalorder %s30, 0
      %p196 = por %p194, %p195
      %p197 = scmp.ne.s32.totalorder %s185, %s186
      %p198 = scmp.eq.s32.totalorder %s31, 1
      %p199 = por %p197, %p198
      %p201 = scmp.ne.s32.totalorder %s186, %s200
      %p202 = scmp.eq.s32.totalorder %s31, 0
      %p203 = por %p201, %p202
      %s205 = sadd.s32 %s204, 1
      %p208 = scmp.eq.s32.totalorder %s25, 1
      %p209 = scmp.ne.s32.totalorder %s204, %s206
      %p210 = scmp.eq.s32.totalorder %s25, 0
      %p211 = por %p209, %p210
      %p212 = scmp.ne.s32.totalorder %s204, %s206
      %p213 = scmp.eq.s32.totalorder %s30, 1
      %p214 = por %p212, %p213
      %p215 = scmp.ne.s32.totalorder %s206, %s207
      %p216 = scmp.eq.s32.totalorder %s30, 0
      %p217 = por %p215, %p216
      %p218 = scmp.ne.s32.totalorder %s206, %s207
      %p219 = scmp.eq.s32.totalorder %s31, 1
      %p220 = por %p218, %p219
      %p222 = scmp.ne.s32.totalorder %s207, %s221
      %p223 = scmp.eq.s32.totalorder %s31, 0
      %p224 = por %p222, %p223
      %s226 = sadd.s32 %s225, 1
      %p229 = scmp.eq.s32.totalorder %s25, 1
      %p230 = scmp.ne.s32.totalorder %s225, %s227
      %p231 = scmp.eq.s32.totalorder %s25, 0
      %p232 = por %p230, %p231
      %p233 = scmp.ne.s32.totalorder %s225, %s227
      %p234 = scmp.eq.s32.totalorder %s30, 1
      %p235 = por %p233, %p234
      %p236 = scmp.ne.s32.totalorder %s227, %s228
      %p237 = scmp.eq.s32.totalorder %s30, 0
      %p238 = por %p236, %p237
      %p239 = scmp.ne.s32.totalorder %s227, %s228
      %p240 = scmp.eq.s32.totalorder %s31, 1
      %p241 = por %p239, %p240
      %p243 = scmp.ne.s32.totalorder %s228, %s242
      %p244 = scmp.eq.s32.totalorder %s31, 0
      %p245 = por %p243, %p244
      %s247 = sadd.s32 %s246, 1
      %p250 = scmp.eq.s32.totalorder %s25, 1
      %p251 = scmp.ne.s32.totalorder %s246, %s248
      %p252 = scmp.eq.s32.totalorder %s25, 0
      %p253 = por %p251, %p252
      %p254 = scmp.ne.s32.totalorder %s246, %s248
      %p255 = scmp.eq.s32.totalorder %s30, 1
      %p256 = por %p254, %p255
      %p257 = scmp.ne.s32.totalorder %s248, %s249
      %p258 = scmp.eq.s32.totalorder %s30, 0
      %p259 = por %p257, %p258
      %p260 = scmp.ne.s32.totalorder %s248, %s249
      %p261 = scmp.eq.s32.totalorder %s31, 1
      %p262 = por %p260, %p261
      %p264 = scmp.ne.s32.totalorder %s249, %s263
      %p265 = scmp.eq.s32.totalorder %s31, 0
      %p266 = por %p264, %p265
      %s268 = sadd.s32 %s267, 1
      %p271 = scmp.eq.s32.totalorder %s25, 1
      %p272 = scmp.ne.s32.totalorder %s267, %s269
      %p273 = scmp.eq.s32.totalorder %s25, 0
      %p274 = por %p272, %p273
      %p275 = scmp.ne.s32.totalorder %s267, %s269
      %p276 = scmp.eq.s32.totalorder %s30, 1
      %p277 = por %p275, %p276
      %p278 = scmp.ne.s32.totalorder %s269, %s270
      %p279 = scmp.eq.s32.totalorder %s30, 0
      %p280 = por %p278, %p279
      %p281 = scmp.ne.s32.totalorder %s269, %s270
      %p282 = scmp.eq.s32.totalorder %s31, 1
      %p283 = por %p281, %p282
      %p285 = scmp.ne.s32.totalorder %s270, %s284
      %p286 = scmp.eq.s32.totalorder %s31, 0
      %p287 = por %p285, %p286
      %s289 = sadd.s32 %s288, 1
      %p292 = scmp.eq.s32.totalorder %s25, 1
      %p293 = scmp.ne.s32.totalorder %s288, %s290
      %p294 = scmp.eq.s32.totalorder %s25, 0
      %p295 = por %p293, %p294
      %p296 = scmp.ne.s32.totalorder %s288, %s290
      %p297 = scmp.eq.s32.totalorder %s30, 1
      %p298 = por %p296, %p297
      %p299 = scmp.ne.s32.totalorder %s290, %s291
      %p300 = scmp.eq.s32.totalorder %s30, 0
      %p301 = por %p299, %p300
      %p302 = scmp.ne.s32.totalorder %s290, %s291
      %p303 = scmp.eq.s32.totalorder %s31, 1
      %p304 = por %p302, %p303
      %p306 = scmp.ne.s32.totalorder %s291, %s305
      %p307 = scmp.eq.s32.totalorder %s31, 0
      %p308 = por %p306, %p307
      %s310 = sadd.s32 %s309, 1
      %p313 = scmp.eq.s32.totalorder %s25, 1
      %p314 = scmp.ne.s32.totalorder %s309, %s311
      %p315 = scmp.eq.s32.totalorder %s25, 0
      %p316 = por %p314, %p315
      %p317 = scmp.ne.s32.totalorder %s309, %s311
      %p318 = scmp.eq.s32.totalorder %s30, 1
      %p319 = por %p317, %p318
      %p320 = scmp.ne.s32.totalorder %s311, %s312
      %p321 = scmp.eq.s32.totalorder %s30, 0
      %p322 = por %p320, %p321
      %p323 = scmp.ne.s32.totalorder %s311, %s312
      %p324 = scmp.eq.s32.totalorder %s31, 1
      %p325 = por %p323, %p324
      %p327 = scmp.ne.s32.totalorder %s312, %s326
      %p328 = scmp.eq.s32.totalorder %s31, 0
      %p329 = por %p327, %p328
      %s331 = sadd.s32 %s330, 1
      %p334 = scmp.eq.s32.totalorder %s25, 1
      %p335 = scmp.ne.s32.totalorder %s330, %s332
      %p336 = scmp.eq.s32.totalorder %s25, 0
      %p337 = por %p335, %p336
      %p338 = scmp.ne.s32.totalorder %s330, %s332
      %p339 = scmp.eq.s32.totalorder %s30, 1
      %p340 = por %p338, %p339
      %p341 = scmp.ne.s32.totalorder %s332, %s333
      %p342 = scmp.eq.s32.totalorder %s30, 0
      %p343 = por %p341, %p342
      %p344 = scmp.ne.s32.totalorder %s332, %s333
      %p345 = scmp.eq.s32.totalorder %s31, 1
      %p346 = por %p344, %p345
      %p348 = scmp.ne.s32.totalorder %s333, %s347
      %p349 = scmp.eq.s32.totalorder %s31, 0
      %p350 = por %p348, %p349
      %s351 = ssub.s32 %s32, %s44
      %s352 = ssub.s32 %s33, %s40
      %s353 = sor.u32 %s351, %s352
      %p354 = scmp.eq.s32.totalorder %s353, 0
      %s356 = sadd.s32 %s355, 1
      %s357 = scalar_select %p354, %s355, %s356
      %p360 = pneg %p354
      %p361 = scmp.eq.s32.totalorder %s25, 1
      %p362 = por %p360, %p361
      %p363 = scmp.ne.s32.totalorder %s355, %s358
      %p364 = scmp.eq.s32.totalorder %s25, 0
      %p365 = por %p363, %p364
      %p366 = scmp.ne.s32.totalorder %s355, %s358
      %p367 = scmp.eq.s32.totalorder %s30, 1
      %p368 = por %p366, %p367
      %p369 = scmp.ne.s32.totalorder %s358, %s359
      %p370 = scmp.eq.s32.totalorder %s30, 0
      %p371 = por %p369, %p370
      %p372 = scmp.ne.s32.totalorder %s358, %s359
      %p373 = scmp.eq.s32.totalorder %s31, 1
      %p374 = por %p372, %p373
      %p376 = scmp.ne.s32.totalorder %s359, %s375
      %p377 = scmp.eq.s32.totalorder %s31, 0
      %p378 = por %p376, %p377
      %p379 = scmp.le.s32.totalorder 1, %s25
      %p380 = scmp.lt.s32.totalorder %s25, 3
      %p381 = pnand %p379, %p380
      %p382 = pneg %p381
      // Predicated region
      $region9: #{tpu_custom_call.1} parent=5 // pred_check
        _
      $region10: #{tpu_custom_call.1} parent=5 // pred_check_branch
        %384 = sbr.rel (%p381) target = $region12
      $region11: #{tpu_custom_call.1} parent=5 // pred_region
        %s385 = ssub.s32 %s25, 1
        // Predicated region
        $region13: #{tpu_custom_call.1} parent=11 // pred_check
          %p386 = pneg %p112
        $region14: #{tpu_custom_call.1} parent=11 // pred_check_branch
          %388 = sbr.rel (%p386) target = $region16
        $region15: #{tpu_custom_call.1} parent=11 // pred_region
          _
        $region16: #{tpu_custom_call.1} parent=11 // pred_fallthru
          _
        // Predicated region
        $region17: #{tpu_custom_call.1} parent=11 // pred_check
          %p389 = pneg %p133
        $region18: #{tpu_custom_call.1} parent=11 // pred_check_branch
          %391 = sbr.rel (%p389) target = $region20
        $region19: #{tpu_custom_call.1} parent=11 // pred_region
          _
        $region20: #{tpu_custom_call.1} parent=11 // pred_fallthru
          _
        // Predicated region
        $region21: #{tpu_custom_call.1} parent=11 // pred_check
          %p392 = pneg %p154
        $region22: #{tpu_custom_call.1} parent=11 // pred_check_branch
          %394 = sbr.rel (%p392) target = $region24
        $region23: #{tpu_custom_call.1} parent=11 // pred_region
          _
        $region24: #{tpu_custom_call.1} parent=11 // pred_fallthru
          _
        // Predicated region
        $region25: #{tpu_custom_call.1} parent=11 // pred_check
          %p395 = pneg %p175
        $region26: #{tpu_custom_call.1} parent=11 // pred_check_branch
          %397 = sbr.rel (%p395) target = $region28
        $region27: #{tpu_custom_call.1} parent=11 // pred_region
          _
        $region28: #{tpu_custom_call.1} parent=11 // pred_fallthru
          _
        // Predicated region
        $region29: #{tpu_custom_call.1} parent=11 // pred_check
          %p398 = pneg %p196
        $region30: #{tpu_custom_call.1} parent=11 // pred_check_branch
          %400 = sbr.rel (%p398) target = $region32
        $region31: #{tpu_custom_call.1} parent=11 // pred_region
          _
        $region32: #{tpu_custom_call.1} parent=11 // pred_fallthru
          _
        // Predicated region
        $region33: #{tpu_custom_call.1} parent=11 // pred_check
          %p401 = pneg %p217
        $region34: #{tpu_custom_call.1} parent=11 // pred_check_branch
          %403 = sbr.rel (%p401) target = $region36
        $region35: #{tpu_custom_call.1} parent=11 // pred_region
          %s405 = ssub.s32 16, 16
          %406 = vsyncadd [#allocation3], %s405
          %s408 = sshll.u32 [#allocation2], 4
          %s409 = int_to_ptr.vmem [resolvable:$true] %s408
          %411 = dma.hbm_to_vmem [thread:$0]  %s7, 16, %s409, [#allocation3]
        $region36: #{tpu_custom_call.1} parent=11 // pred_fallthru
          _
        // Predicated region
        $region37: #{tpu_custom_call.1} parent=11 // pred_check
          %p412 = pneg %p238
        $region38: #{tpu_custom_call.1} parent=11 // pred_check_branch
          %414 = sbr.rel (%p412) target = $region40
        $region39: #{tpu_custom_call.1} parent=11 // pred_region
          %s416 = ssub.s32 16, 16
          %417 = vsyncadd [#allocation6], %s416
          %s419 = sshll.u32 [#allocation5], 4
          %s420 = int_to_ptr.vmem [resolvable:$true] %s419
          %422 = dma.hbm_to_vmem [thread:$0]  %s8, 16, %s420, [#allocation6]
        $region40: #{tpu_custom_call.1} parent=11 // pred_fallthru
          _
        // Predicated region
        $region41: #{tpu_custom_call.1} parent=11 // pred_check
          %p423 = pneg %p259
        $region42: #{tpu_custom_call.1} parent=11 // pred_check_branch
          %425 = sbr.rel (%p423) target = $region44
        $region43: #{tpu_custom_call.1} parent=11 // pred_region
          %s427 = ssub.s32 16, 16
          %428 = vsyncadd [#allocation6], %s427
          %s430 = sshll.u32 [#allocation7], 4
          %s431 = int_to_ptr.vmem [resolvable:$true] %s430
          %433 = dma.hbm_to_vmem [thread:$0]  %s9, 16, %s431, [#allocation6]
        $region44: #{tpu_custom_call.1} parent=11 // pred_fallthru
          _
        // Predicated region
        $region45: #{tpu_custom_call.1} parent=11 // pred_check
          %p434 = pneg %p280
        $region46: #{tpu_custom_call.1} parent=11 // pred_check_branch
          %436 = sbr.rel (%p434) target = $region48
        $region47: #{tpu_custom_call.1} parent=11 // pred_region
          _
        $region48: #{tpu_custom_call.1} parent=11 // pred_fallthru
          _
        // Predicated region
        $region49: #{tpu_custom_call.1} parent=11 // pred_check
          %p437 = pneg %p301
        $region50: #{tpu_custom_call.1} parent=11 // pred_check_branch
          %439 = sbr.rel (%p437) target = $region52
        $region51: #{tpu_custom_call.1} parent=11 // pred_region
          _
        $region52: #{tpu_custom_call.1} parent=11 // pred_fallthru
          _
        // Predicated region
        $region53: #{tpu_custom_call.1} parent=11 // pred_check
          %p440 = pneg %p322
        $region54: #{tpu_custom_call.1} parent=11 // pred_check_branch
          %442 = sbr.rel (%p440) target = $region56
        $region55: #{tpu_custom_call.1} parent=11 // pred_region
          _
        $region56: #{tpu_custom_call.1} parent=11 // pred_fallthru
          _
        // Predicated region
        $region57: #{tpu_custom_call.1} parent=11 // pred_check
          %p443 = pneg %p343
        $region58: #{tpu_custom_call.1} parent=11 // pred_check_branch
          %445 = sbr.rel (%p443) target = $region60
        $region59: #{tpu_custom_call.1} parent=11 // pred_region
          _
        $region60: #{tpu_custom_call.1} parent=11 // pred_fallthru
          _
      $region12: #{tpu_custom_call.1} parent=5 // pred_fallthru
        _
      %p446 = scmp.lt.s32.totalorder %s25, 2
      // Predicated region
      $region61: #{tpu_custom_call.1} parent=5 // pred_check
        %p447 = pneg %p446
      $region62: #{tpu_custom_call.1} parent=5 // pred_check_branch
        %449 = sbr.rel (%p447) target = $region64
      $region63: #{tpu_custom_call.1} parent=5 // pred_region
        // Predicated region
        $region65: #{tpu_custom_call.1} parent=63 // pred_check
          %p450 = pneg %p59
        $region66: #{tpu_custom_call.1} parent=63 // pred_check_branch
          %452 = sbr.rel (%p450) target = $region68
        $region67: #{tpu_custom_call.1} parent=63 // pred_region
          %p453 = scmp.lt.s32.totalorder %s32, 1
          %s454 = scalar_select %p453, %s32, 1
          %p455 = scmp.lt.s32.totalorder %s33, 0
          %s456 = scalar_select %p455, %s33, 0
          %s457 = sadd.s32 %s456, %s454
          %s458 = smul.addr %s457, 8
          %s459 = scalar_lea.vmem %s0, %s458
        $region68: #{tpu_custom_call.1} parent=63 // pred_fallthru
          _
        // Predicated region
        $region69: #{tpu_custom_call.1} parent=63 // pred_check
          %p460 = pneg %p85
        $region70: #{tpu_custom_call.1} parent=63 // pred_check_branch
          %462 = sbr.rel (%p460) target = $region72
        $region71: #{tpu_custom_call.1} parent=63 // pred_region
          %p463 = scmp.lt.s32.totalorder %s32, 1
          %s464 = scalar_select %p463, %s32, 1
          %s465 = smul.addr %s464, 8
          %s466 = scalar_lea.vmem %s1, %s465
        $region72: #{tpu_custom_call.1} parent=63 // pred_fallthru
          _
      $region64: #{tpu_custom_call.1} parent=5 // pred_fallthru
        _
      %p467 = scmp.le.s32.totalorder 1, %s25
      %p468 = scmp.lt.s32.totalorder %s25, 3
      %p469 = pnand %p467, %p468
      %p470 = pneg %p469
      // Predicated region
      $region73: #{tpu_custom_call.1} parent=5 // pred_check
        _
      $region74: #{tpu_custom_call.1} parent=5 // pred_check_branch
        %472 = sbr.rel (%p469) target = $region76
      $region75: #{tpu_custom_call.1} parent=5 // pred_region
        %s473 = ssub.s32 %s25, 1
        // Predicated region
        $region77: #{tpu_custom_call.1} parent=75 // pred_check
          %p474 = pneg %p217
        $region78: #{tpu_custom_call.1} parent=75 // pred_check_branch
          %476 = sbr.rel (%p474) target = $region80
        $region79: #{tpu_custom_call.1} parent=75 // pred_region
          %477 = dma.done [#allocation3], 16
        $region80: #{tpu_custom_call.1} parent=75 // pred_fallthru
          _
        // Predicated region
        $region81: #{tpu_custom_call.1} parent=75 // pred_check
          %p478 = pneg %p238
        $region82: #{tpu_custom_call.1} parent=75 // pred_check_branch
          %480 = sbr.rel (%p478) target = $region84
        $region83: #{tpu_custom_call.1} parent=75 // pred_region
          %481 = dma.done [#allocation6], 16
        $region84: #{tpu_custom_call.1} parent=75 // pred_fallthru
          _
        // Predicated region
        $region85: #{tpu_custom_call.1} parent=75 // pred_check
          %p482 = pneg %p259
        $region86: #{tpu_custom_call.1} parent=75 // pred_check_branch
          %484 = sbr.rel (%p482) target = $region88
        $region87: #{tpu_custom_call.1} parent=75 // pred_region
          %485 = dma.done [#allocation6], 16
        $region88: #{tpu_custom_call.1} parent=75 // pred_fallthru
          _
        %p486 = scmp.lt.s32.totalorder %s34, 1
        %s487 = scalar_select %p486, %s34, 1
        %p488 = scmp.lt.s32.totalorder %s35, 0
        %s489 = scalar_select %p488, %s35, 0
        %s490 = sadd.s32 %s489, %s487
        %s491 = smul.addr %s490, 8
        %s492 = scalar_lea.vmem %s0, %s491
        %p493 = pneg %p65
        %p494 = pneg %p62
        %p495 = scmp.lt.s32.totalorder %s34, 1
        %s496 = scalar_select %p495, %s34, 1
        %s497 = smul.addr %s496, 8
        %s498 = scalar_lea.vmem %s1, %s497
        %p499 = pneg %p91
        %p500 = pneg %p88
        %p501 = pneg %p112
        %p502 = pneg %p109
        %p503 = pneg %p133
        %p504 = pneg %p130
        %p505 = pneg %p154
        %p506 = pneg %p151
        %p507 = pneg %p175
        %p508 = pneg %p172
        %p509 = pneg %p196
        %p510 = pneg %p193
        %p511 = pneg %p217
        %p512 = pneg %p214
        %p513 = pneg %p238
        %p514 = pneg %p235
        %p515 = pneg %p259
        %p516 = pneg %p256
        %p517 = pneg %p280
        %p518 = pneg %p277
        %p519 = pneg %p301
        %p520 = pneg %p298
        %p521 = pneg %p322
        %p522 = pneg %p319
        %p523 = pneg %p343
        %p524 = pneg %p340
        %p525 = pneg %p371
        %p526 = pneg %p368
        %s527 = sand.u32 %s358, 1
        %s528 = scalar_lea.sflag [#allocation4], %s527
        %s529 = sand.u32 %s358, 1
        %s530 = smul.addr %s529, 8
        %s531 = scalar_lea.vmem [#allocation8], %s530
        %p532 = scmp.lt.s32.totalorder %s34, 1
        %s533 = scalar_select %p532, %s34, 1
        %p534 = scmp.lt.s32.totalorder %s35, 0
        %s535 = scalar_select %p534, %s35, 0
        %s536 = sadd.s32 %s535, %s533
        %s537 = smul.addr %s536, 8
        %s538 = scalar_lea.vmem %s0, %s537
        %p539 = scmp.lt.s32.totalorder %s34, 1
        %s540 = scalar_select %p539, %s34, 1
        %s541 = smul.addr %s540, 8
        %s542 = scalar_lea.vmem %s1, %s541
        %v544 = vld [vmem:[%s538] sm:$0xff]
        %v545 = vld [vmem:[%s542] sm:$0xff]
        %vm546 = vcmask 261120
        %v547 = vsel %vm546, %v544, 0.0
        %548 = vadd.xlane.f32.xlu0 %v547
        %v549 = vpop.xlane.xlu0 %548
        %v550 = vrcp.pop 32.0
        %v551 = vmul.f32 %v549, %v550
        %v552 = vsub.f32 %v544, %v551
        %v553 = vmul.f32 %v552, %v552
        %v554 = vsel %vm546, %v553, 0.0
        %555 = vadd.xlane.f32.xlu0 %v554
        %v556 = vpop.xlane.xlu0 %555
        %v557 = vmul.f32 %v556, %v550
        %v558 = vadd.f32 %v557, 1e-05
        %v559 = vrsqrt.pop %v558
        %v560 = vmul.f32 %v552, %v559
        %v561 = vld [vmem:[%s6] sm:$0x1]
        %v563 = vlaneseq
        %v564 = vshrl.u32 %v563, 7
        %v565 = vsub.s32 0, %v564
        %v566 = vrot.slane %v561, %v565
        %v568 = vmul.f32 %v560, %v566
        %v569 = vld [vmem:[#allocation2] sm:$0x1]
        %v571 = vlaneseq
        %v572 = vshrl.u32 %v571, 7
        %v573 = vsub.s32 0, %v572
        %v574 = vrot.slane %v569, %v573
        %v576 = vadd.f32 %v568, %v574
        %v577 = vpack.c.bf16 %v576, %v576
        %v578 = vsel %vm546, %v545, 0.0
        %579 = vadd.xlane.f32.xlu0 %v578
        %v580 = vpop.xlane.xlu0 %579
        %v581 = vmul.f32 %v580, %v550
        %v582 = vsub.f32 %v545, %v581
        %v583 = vmul.f32 %v582, %v582
        %v584 = vsel %vm546, %v583, 0.0
        %585 = vadd.xlane.f32.xlu0 %v584
        %v586 = vpop.xlane.xlu0 %585
        %v587 = vmul.f32 %v586, %v550
        %v588 = vadd.f32 %v587, 1e-05
        %v589 = vrsqrt.pop %v588
        %v590 = vmul.f32 %v582, %v589
        %v591 = vmul.f32 %v590, %v566
        %v592 = vadd.f32 %v591, %v574
        %v593 = vpack.c.bf16 %v592, %v592
        %v594 = vld [vmem:[%s2] sm:$0xf]
        %v595 = vld [vmem:[%s2 + $0x4] sm:$0xf]
        %v596 = vld [vmem:[%s2 + $0x8] sm:$0xf]
        %v597 = vld [vmem:[%s2 + $0xc] sm:$0xf]
        %v602 = vunpack.c.l.b16 %v594
        %v603 = vunpack.c.l.b16 %v595
        %v604 = vunpack.c.l.b16 %v596
        %v605 = vunpack.c.l.b16 %v597
        %v606 = vpack.c.b16 %v603, %v602
        %v607 = vpack.c.b16 %v605, %v604
        %v611 = vsel %vm546, %v577, 0
        %613 = vmatprep.subr.bf16.mxu0 0
        %614 = vmatpush1.bf16.msra.mxu0 %v606
        %615 = vmatprep.subr.bf16.mxu0 0
        %616 = vmatpush1.bf16.msra.mxu0 %v607
        %617 = vmatprep.subr.bf16.mxu0 0
        %618 = vmatpush1.bf16.msra.mxu0 0
        %619 = vmatprep.subr.bf16.mxu0 0
        %620 = vmatpush1.bf16.msra.mxu0 0
        %621 = vmatprep.subr.bf16.mxu0 0
        %622 = vmatpush1.bf16.msra.mxu0 0
        %623 = vmatprep.subr.bf16.mxu0 0
        %624 = vmatpush1.bf16.msra.mxu0 0
        %625 = vmatprep.subr.bf16.mxu0 0
        %626 = vmatpush1.bf16.msra.mxu0 0
        %627 = vmatprep.subr.bf16.mxu0 0
        %628 = vmatpush1.bf16.msra.mxu0 0
        %629 = vmatprep.subr.bf16.mxu0 0
        %630 = vmatpush1.bf16.msra.mxu0 0
        %631 = vmatprep.subr.bf16.mxu0 0
        %632 = vmatpush1.bf16.msra.mxu0 0
        %633 = vmatprep.subr.bf16.mxu0 0
        %634 = vmatpush1.bf16.msra.mxu0 0
        %635 = vmatprep.subr.bf16.mxu0 0
        %636 = vmatpush1.bf16.msra.mxu0 0
        %637 = vmatprep.subr.bf16.mxu0 0
        %638 = vmatpush1.bf16.msra.mxu0 0
        %639 = vmatprep.subr.bf16.mxu0 0
        %640 = vmatpush1.bf16.msra.mxu0 0
        %641 = vmatprep.subr.bf16.mxu0 0
        %642 = vmatpush1.bf16.msra.mxu0 0
        %643 = vmatprep.subr.bf16.mxu0 0
        %644 = vmatpush1.bf16.msra.mxu0 0
        %645 = vmatprep.mubr.bf16.mxu0 0
        %646 = vmatmul.mubr.bf16.gmra.mrb[0].mxu0 %v611
        %v647 = vpop.f32.mrb[0].mxu0
        %v648 = vadd.f32 0.0, %v647
        %v649 = vpop.f32.mrb[0].mxu0
        %v650 = vpop.f32.mrb[0].mxu0
        %v651 = vpop.f32.mrb[0].mxu0
        %652 = vdwg.mxu0
        %v653 = vld [vmem:[%s3] sm:$0xf]
        %v654 = vld [vmem:[%s3 + $0x4] sm:$0xf]
        %v655 = vld [vmem:[%s3 + $0x8] sm:$0xf]
        %v656 = vld [vmem:[%s3 + $0xc] sm:$0xf]
        %v661 = vunpack.c.l.b16 %v653
        %v662 = vunpack.c.l.b16 %v654
        %v663 = vunpack.c.l.b16 %v655
        %v664 = vunpack.c.l.b16 %v656
        %v665 = vpack.c.b16 %v662, %v661
        %v666 = vpack.c.b16 %v664, %v663
        %v670 = vsel %vm546, %v593, 0
        %672 = vmatprep.subr.bf16.mxu0 0
        %673 = vmatpush1.bf16.msra.mxu0 %v665
        %674 = vmatprep.subr.bf16.mxu0 0
        %675 = vmatpush1.bf16.msra.mxu0 %v666
        %676 = vmatprep.subr.bf16.mxu0 0
        %677 = vmatpush1.bf16.msra.mxu0 0
        %678 = vmatprep.subr.bf16.mxu0 0
        %679 = vmatpush1.bf16.msra.mxu0 0
        %680 = vmatprep.subr.bf16.mxu0 0
        %681 = vmatpush1.bf16.msra.mxu0 0
        %682 = vmatprep.subr.bf16.mxu0 0
        %683 = vmatpush1.bf16.msra.mxu0 0
        %684 = vmatprep.subr.bf16.mxu0 0
        %685 = vmatpush1.bf16.msra.mxu0 0
        %686 = vmatprep.subr.bf16.mxu0 0
        %687 = vmatpush1.bf16.msra.mxu0 0
        %688 = vmatprep.subr.bf16.mxu0 0
        %689 = vmatpush1.bf16.msra.mxu0 0
        %690 = vmatprep.subr.bf16.mxu0 0
        %691 = vmatpush1.bf16.msra.mxu0 0
        %692 = vmatprep.subr.bf16.mxu0 0
        %693 = vmatpush1.bf16.msra.mxu0 0
        %694 = vmatprep.subr.bf16.mxu0 0
        %695 = vmatpush1.bf16.msra.mxu0 0
        %696 = vmatprep.subr.bf16.mxu0 0
        %697 = vmatpush1.bf16.msra.mxu0 0
        %698 = vmatprep.subr.bf16.mxu0 0
        %699 = vmatpush1.bf16.msra.mxu0 0
        %700 = vmatprep.subr.bf16.mxu0 0
        %701 = vmatpush1.bf16.msra.mxu0 0
        %702 = vmatprep.subr.bf16.mxu0 0
        %703 = vmatpush1.bf16.msra.mxu0 0
        %704 = vmatprep.mubr.bf16.mxu0 0
        %705 = vmatmul.mubr.bf16.gmra.mrb[0].mxu0 %v670
        %v706 = vpop.f32.mrb[0].mxu0
        %v707 = vadd.f32 0.0, %v706
        %v708 = vpop.f32.mrb[0].mxu0
        %v709 = vpop.f32.mrb[0].mxu0
        %v710 = vpop.f32.mrb[0].mxu0
        %711 = vdwg.mxu0
        %v712 = vpack.c.bf16 %v648, %v648
        %v713 = vpack.c.bf16 %v707, %v707
        %s714 = smul.u32 %s35, 8
        %v715 = vlaneseq
        %v716 = vshrl.u32 %v715, 7
        %v717 = vstv %s714
        %v718 = vadd.s32 %v717, %v716
        %v719 = vlaneseq
        %v720 = vand.u32 %v719, 127
        %vm721 = vcmp.le.s32.totalorder %v720, %v718
        %v722 = vsel %vm721, 0.0, -inf
        %vm723 = vcmask 64512
        %v725 = vsel %vm723, %v712, 0
        %v728 = vsel %vm723, %v713, 0
        %730 = vmatprep.subr.bf16.mxu0 0
        %731 = vmatpush1.bf16.xpose.msra.mxu0 %v728
        %732 = vmatprep.subr.bf16.mxu0 0
        %733 = vmatpush1.bf16.xpose.msra.mxu0 0
        %734 = vmatprep.subr.bf16.mxu0 0
        %735 = vmatpush1.bf16.xpose.msra.mxu0 0
        %736 = vmatprep.subr.bf16.mxu0 0
        %737 = vmatpush1.bf16.xpose.msra.mxu0 0
        %738 = vmatprep.subr.bf16.mxu0 0
        %739 = vmatpush1.bf16.xpose.msra.mxu0 0
        %740 = vmatprep.subr.bf16.mxu0 0
        %741 = vmatpush1.bf16.xpose.msra.mxu0 0
        %742 = vmatprep.subr.bf16.mxu0 0
        %743 = vmatpush1.bf16.xpose.msra.mxu0 0
        %744 = vmatprep.subr.bf16.mxu0 0
        %745 = vmatpush1.bf16.xpose.msra.mxu0 0
        %746 = vmatprep.subr.bf16.mxu0 0
        %747 = vmatpush1.bf16.xpose.msra.mxu0 0
        %748 = vmatprep.subr.bf16.mxu0 0
        %749 = vmatpush1.bf16.xpose.msra.mxu0 0
        %750 = vmatprep.subr.bf16.mxu0 0
        %751 = vmatpush1.bf16.xpose.msra.mxu0 0
        %752 = vmatprep.subr.bf16.mxu0 0
        %753 = vmatpush1.bf16.xpose.msra.mxu0 0
        %754 = vmatprep.subr.bf16.mxu0 0
        %755 = vmatpush1.bf16.xpose.msra.mxu0 0
        %756 = vmatprep.subr.bf16.mxu0 0
        %757 = vmatpush1.bf16.xpose.msra.mxu0 0
        %758 = vmatprep.subr.bf16.mxu0 0
        %759 = vmatpush1.bf16.xpose.msra.mxu0 0
        %760 = vmatprep.subr.bf16.mxu0 0
        %761 = vmatpush1.bf16.xpose.msra.mxu0 0
        %762 = vmatprep.mubr.bf16.mxu0 0
        %763 = vmatmul.mubr.bf16.gmra.mrb[0].mxu0 %v725
        %v764 = vpop.f32.mrb[0].mxu0
        %v765 = vadd.f32 0.0, %v764
        %v766 = vpop.f32.mrb[0].mxu0
        %v767 = vpop.f32.mrb[0].mxu0
        %v768 = vpop.f32.mrb[0].mxu0
        %769 = vdwg.mxu0
        %v770 = vmul.f32 %v765, 0.35355338
        %v771 = vadd.f32 %v770, %v722
        %v772 = vsel %vm723, %v771, -inf
        %773 = vmax.xlane.f32.xlu0 %v772
        %v774 = vpop.xlane.xlu0 %773
        %v775 = vsub.f32 %v771, %v774
        %v776 = vmul.f32 %v775, 1.442695
        %v777 = vpow.pop %v776
        %v778 = vsel %vm723, %v777, 0.0
        %779 = vadd.xlane.f32.xlu0 %v778
        %v780 = vpop.xlane.xlu0 %779
        %v781 = vpack.c.bf16 %v777, %v777
        %783 = vrot.lane.b32.xlu0 %v713, 96
        %v784 = vpop.permute.xlu0 %783
        %v786 = vsel %vm723, %v781, 0
        %vm788 = vcmask 1043456
        %v790 = vsel %vm788, %v784, 0
        %792 = vmatprep.subr.bf16.mxu0 0
        %793 = vmatpush1.bf16.msra.mxu0 %v790
        %794 = vmatprep.subr.bf16.mxu0 0
        %795 = vmatpush1.bf16.msra.mxu0 0
        %796 = vmatprep.subr.bf16.mxu0 0
        %797 = vmatpush1.bf16.msra.mxu0 0
        %798 = vmatprep.subr.bf16.mxu0 0
        %799 = vmatpush1.bf16.msra.mxu0 0
        %800 = vmatprep.subr.bf16.mxu0 0
        %801 = vmatpush1.bf16.msra.mxu0 0
        %802 = vmatprep.subr.bf16.mxu0 0
        %803 = vmatpush1.bf16.msra.mxu0 0
        %804 = vmatprep.subr.bf16.mxu0 0
        %805 = vmatpush1.bf16.msra.mxu0 0
        %806 = vmatprep.subr.bf16.mxu0 0
        %807 = vmatpush1.bf16.msra.mxu0 0
        %808 = vmatprep.subr.bf16.mxu0 0
        %809 = vmatpush1.bf16.msra.mxu0 0
        %810 = vmatprep.subr.bf16.mxu0 0
        %811 = vmatpush1.bf16.msra.mxu0 0
        %812 = vmatprep.subr.bf16.mxu0 0
        %813 = vmatpush1.bf16.msra.mxu0 0
        %814 = vmatprep.subr.bf16.mxu0 0
        %815 = vmatpush1.bf16.msra.mxu0 0
        %816 = vmatprep.subr.bf16.mxu0 0
        %817 = vmatpush1.bf16.msra.mxu0 0
        %818 = vmatprep.subr.bf16.mxu0 0
        %819 = vmatpush1.bf16.msra.mxu0 0
        %820 = vmatprep.subr.bf16.mxu0 0
        %821 = vmatpush1.bf16.msra.mxu0 0
        %822 = vmatprep.subr.bf16.mxu0 0
        %823 = vmatpush1.bf16.msra.mxu0 0
        %824 = vmatprep.mubr.bf16.mxu0 0
        %825 = vmatmul.mubr.bf16.gmra.mrb[0].mxu0 %v786
        %v826 = vpop.f32.mrb[0].mxu0
        %v827 = vadd.f32 0.0, %v826
        %v828 = vpop.f32.mrb[0].mxu0
        %v829 = vpop.f32.mrb[0].mxu0
        %v830 = vpop.f32.mrb[0].mxu0
        %831 = vdwg.mxu0
        %v832 = vrcp.pop %v780
        %v833 = vmul.f32 %v827, %v832
        %835 = vrot.lane.b32.xlu0 %v712, 120
        %v836 = vpop.permute.xlu0 %835
        %837 = vrot.lane.b32.xlu0 %v713, 120
        %v838 = vpop.permute.xlu0 %837
        %v840 = vsel %vm723, %v836, 0
        %v843 = vsel %vm723, %v838, 0
        %845 = vmatprep.subr.bf16.mxu0 0
        %846 = vmatpush1.bf16.xpose.msra.mxu0 %v843
        %847 = vmatprep.subr.bf16.mxu0 0
        %848 = vmatpush1.bf16.xpose.msra.mxu0 0
        %849 = vmatprep.subr.bf16.mxu0 0
        %850 = vmatpush1.bf16.xpose.msra.mxu0 0
        %851 = vmatprep.subr.bf16.mxu0 0
        %852 = vmatpush1.bf16.xpose.msra.mxu0 0
        %853 = vmatprep.subr.bf16.mxu0 0
        %854 = vmatpush1.bf16.xpose.msra.mxu0 0
        %855 = vmatprep.subr.bf16.mxu0 0
        %856 = vmatpush1.bf16.xpose.msra.mxu0 0
        %857 = vmatprep.subr.bf16.mxu0 0
        %858 = vmatpush1.bf16.xpose.msra.mxu0 0
        %859 = vmatprep.subr.bf16.mxu0 0
        %860 = vmatpush1.bf16.xpose.msra.mxu0 0
        %861 = vmatprep.subr.bf16.mxu0 0
        %862 = vmatpush1.bf16.xpose.msra.mxu0 0
        %863 = vmatprep.subr.bf16.mxu0 0
        %864 = vmatpush1.bf16.xpose.msra.mxu0 0
        %865 = vmatprep.subr.bf16.mxu0 0
        %866 = vmatpush1.bf16.xpose.msra.mxu0 0
        %867 = vmatprep.subr.bf16.mxu0 0
        %868 = vmatpush1.bf16.xpose.msra.mxu0 0
        %869 = vmatprep.subr.bf16.mxu0 0
        %870 = vmatpush1.bf16.xpose.msra.mxu0 0
        %871 = vmatprep.subr.bf16.mxu0 0
        %872 = vmatpush1.bf16.xpose.msra.mxu0 0
        %873 = vmatprep.subr.bf16.mxu0 0
        %874 = vmatpush1.bf16.xpose.msra.mxu0 0
        %875 = vmatprep.subr.bf16.mxu0 0
        %876 = vmatpush1.bf16.xpose.msra.mxu0 0
        %877 = vmatprep.mubr.bf16.mxu0 0
        %878 = vmatmul.mubr.bf16.gmra.mrb[0].mxu0 %v840
        %v879 = vpop.f32.mrb[0].mxu0
        %v880 = vadd.f32 0.0, %v879
        %v881 = vpop.f32.mrb[0].mxu0
        %v882 = vpop.f32.mrb[0].mxu0
        %v883 = vpop.f32.mrb[0].mxu0
        %884 = vdwg.mxu0
        %v885 = vmul.f32 %v880, 0.35355338
        %v886 = vadd.f32 %v885, %v722
        %v887 = vsel %vm723, %v886, -inf
        %888 = vmax.xlane.f32.xlu0 %v887
        %v889 = vpop.xlane.xlu0 %888
        %v890 = vsub.f32 %v886, %v889
        %v891 = vmul.f32 %v890, 1.442695
        %v892 = vpow.pop %v891
        %v893 = vsel %vm723, %v892, 0.0
        %894 = vadd.xlane.f32.xlu0 %v893
        %v895 = vpop.xlane.xlu0 %894
        %v896 = vpack.c.bf16 %v892, %v892
        %897 = vrot.lane.b32.xlu0 %v713, 88
        %v898 = vpop.permute.xlu0 %897
        %v900 = vsel %vm723, %v896, 0
        %v903 = vsel %vm788, %v898, 0
        %905 = vmatprep.subr.bf16.mxu0 0
        %906 = vmatpush1.bf16.msra.mxu0 %v903
        %907 = vmatprep.subr.bf16.mxu0 0
        %908 = vmatpush1.bf16.msra.mxu0 0
        %909 = vmatprep.subr.bf16.mxu0 0
        %910 = vmatpush1.bf16.msra.mxu0 0
        %911 = vmatprep.subr.bf16.mxu0 0
        %912 = vmatpush1.bf16.msra.mxu0 0
        %913 = vmatprep.subr.bf16.mxu0 0
        %914 = vmatpush1.bf16.msra.mxu0 0
        %915 = vmatprep.subr.bf16.mxu0 0
        %916 = vmatpush1.bf16.msra.mxu0 0
        %917 = vmatprep.subr.bf16.mxu0 0
        %918 = vmatpush1.bf16.msra.mxu0 0
        %919 = vmatprep.subr.bf16.mxu0 0
        %920 = vmatpush1.bf16.msra.mxu0 0
        %921 = vmatprep.subr.bf16.mxu0 0
        %922 = vmatpush1.bf16.msra.mxu0 0
        %923 = vmatprep.subr.bf16.mxu0 0
        %924 = vmatpush1.bf16.msra.mxu0 0
        %925 = vmatprep.subr.bf16.mxu0 0
        %926 = vmatpush1.bf16.msra.mxu0 0
        %927 = vmatprep.subr.bf16.mxu0 0
        %928 = vmatpush1.bf16.msra.mxu0 0
        %929 = vmatprep.subr.bf16.mxu0 0
        %930 = vmatpush1.bf16.msra.mxu0 0
        %931 = vmatprep.subr.bf16.mxu0 0
        %932 = vmatpush1.bf16.msra.mxu0 0
        %933 = vmatprep.subr.bf16.mxu0 0
        %934 = vmatpush1.bf16.msra.mxu0 0
        %935 = vmatprep.subr.bf16.mxu0 0
        %936 = vmatpush1.bf16.msra.mxu0 0
        %937 = vmatprep.mubr.bf16.mxu0 0
        %938 = vmatmul.mubr.bf16.gmra.mrb[0].mxu0 %v900
        %v939 = vpop.f32.mrb[0].mxu0
        %v940 = vadd.f32 0.0, %v939
        %v941 = vpop.f32.mrb[0].mxu0
        %v942 = vpop.f32.mrb[0].mxu0
        %v943 = vpop.f32.mrb[0].mxu0
        %944 = vdwg.mxu0
        %v945 = vrcp.pop %v895
        %v946 = vmul.f32 %v940, %v945
        %947 = vrot.lane.b32.xlu0 %v712, 112
        %v948 = vpop.permute.xlu0 %947
        %949 = vrot.lane.b32.xlu0 %v713, 112
        %v950 = vpop.permute.xlu0 %949
        %v952 = vsel %vm723, %v948, 0
        %v955 = vsel %vm723, %v950, 0
        %957 = vmatprep.subr.bf16.mxu0 0
        %958 = vmatpush1.bf16.xpose.msra.mxu0 %v955
        %959 = vmatprep.subr.bf16.mxu0 0
        %960 = vmatpush1.bf16.xpose.msra.mxu0 0
        %961 = vmatprep.subr.bf16.mxu0 0
        %962 = vmatpush1.bf16.xpose.msra.mxu0 0
        %963 = vmatprep.subr.bf16.mxu0 0
        %964 = vmatpush1.bf16.xpose.msra.mxu0 0
        %965 = vmatprep.subr.bf16.mxu0 0
        %966 = vmatpush1.bf16.xpose.msra.mxu0 0
        %967 = vmatprep.subr.bf16.mxu0 0
        %968 = vmatpush1.bf16.xpose.msra.mxu0 0
        %969 = vmatprep.subr.bf16.mxu0 0
        %970 = vmatpush1.bf16.xpose.msra.mxu0 0
        %971 = vmatprep.subr.bf16.mxu0 0
        %972 = vmatpush1.bf16.xpose.msra.mxu0 0
        %973 = vmatprep.subr.bf16.mxu0 0
        %974 = vmatpush1.bf16.xpose.msra.mxu0 0
        %975 = vmatprep.subr.bf16.mxu0 0
        %976 = vmatpush1.bf16.xpose.msra.mxu0 0
        %977 = vmatprep.subr.bf16.mxu0 0
        %978 = vmatpush1.bf16.xpose.msra.mxu0 0
        %979 = vmatprep.subr.bf16.mxu0 0
        %980 = vmatpush1.bf16.xpose.msra.mxu0 0
        %981 = vmatprep.subr.bf16.mxu0 0
        %982 = vmatpush1.bf16.xpose.msra.mxu0 0
        %983 = vmatprep.subr.bf16.mxu0 0
        %984 = vmatpush1.bf16.xpose.msra.mxu0 0
        %985 = vmatprep.subr.bf16.mxu0 0
        %986 = vmatpush1.bf16.xpose.msra.mxu0 0
        %987 = vmatprep.subr.bf16.mxu0 0
        %988 = vmatpush1.bf16.xpose.msra.mxu0 0
        %989 = vmatprep.mubr.bf16.mxu0 0
        %990 = vmatmul.mubr.bf16.gmra.mrb[0].mxu0 %v952
        %v991 = vpop.f32.mrb[0].mxu0
        %v992 = vadd.f32 0.0, %v991
        %v993 = vpop.f32.mrb[0].mxu0
        %v994 = vpop.f32.mrb[0].mxu0
        %v995 = vpop.f32.mrb[0].mxu0
        %996 = vdwg.mxu0
        %v997 = vmul.f32 %v992, 0.35355338
        %v998 = vadd.f32 %v997, %v722
        %v999 = vsel %vm723, %v998, -inf
        %1000 = vmax.xlane.f32.xlu0 %v999
        %v1001 = vpop.xlane.xlu0 %1000
        %v1002 = vsub.f32 %v998, %v1001
        %v1003 = vmul.f32 %v1002, 1.442695
        %v1004 = vpow.pop %v1003
        %v1005 = vsel %vm723, %v1004, 0.0
        %1006 = vadd.xlane.f32.xlu0 %v1005
        %v1007 = vpop.xlane.xlu0 %1006
        %v1008 = vpack.c.bf16 %v1004, %v1004
        %1009 = vrot.lane.b32.xlu0 %v713, 80
        %v1010 = vpop.permute.xlu0 %1009
        %v1012 = vsel %vm723, %v1008, 0
        %v1015 = vsel %vm788, %v1010, 0
        %1017 = vmatprep.subr.bf16.mxu0 0
        %1018 = vmatpush1.bf16.msra.mxu0 %v1015
        %1019 = vmatprep.subr.bf16.mxu0 0
        %1020 = vmatpush1.bf16.msra.mxu0 0
        %1021 = vmatprep.subr.bf16.mxu0 0
        %1022 = vmatpush1.bf16.msra.mxu0 0
        %1023 = vmatprep.subr.bf16.mxu0 0
        %1024 = vmatpush1.bf16.msra.mxu0 0
        %1025 = vmatprep.subr.bf16.mxu0 0
        %1026 = vmatpush1.bf16.msra.mxu0 0
        %1027 = vmatprep.subr.bf16.mxu0 0
        %1028 = vmatpush1.bf16.msra.mxu0 0
        %1029 = vmatprep.subr.bf16.mxu0 0
        %1030 = vmatpush1.bf16.msra.mxu0 0
        %1031 = vmatprep.subr.bf16.mxu0 0
        %1032 = vmatpush1.bf16.msra.mxu0 0
        %1033 = vmatprep.subr.bf16.mxu0 0
        %1034 = vmatpush1.bf16.msra.mxu0 0
        %1035 = vmatprep.subr.bf16.mxu0 0
        %1036 = vmatpush1.bf16.msra.mxu0 0
        %1037 = vmatprep.subr.bf16.mxu0 0
        %1038 = vmatpush1.bf16.msra.mxu0 0
        %1039 = vmatprep.subr.bf16.mxu0 0
        %1040 = vmatpush1.bf16.msra.mxu0 0
        %1041 = vmatprep.subr.bf16.mxu0 0
        %1042 = vmatpush1.bf16.msra.mxu0 0
        %1043 = vmatprep.subr.bf16.mxu0 0
        %1044 = vmatpush1.bf16.msra.mxu0 0
        %1045 = vmatprep.subr.bf16.mxu0 0
        %1046 = vmatpush1.bf16.msra.mxu0 0
        %1047 = vmatprep.subr.bf16.mxu0 0
        %1048 = vmatpush1.bf16.msra.mxu0 0
        %1049 = vmatprep.mubr.bf16.mxu0 0
        %1050 = vmatmul.mubr.bf16.gmra.mrb[0].mxu0 %v1012
        %v1051 = vpop.f32.mrb[0].mxu0
        %v1052 = vadd.f32 0.0, %v1051
        %v1053 = vpop.f32.mrb[0].mxu0
        %v1054 = vpop.f32.mrb[0].mxu0
        %v1055 = vpop.f32.mrb[0].mxu0
        %1056 = vdwg.mxu0
        %v1057 = vrcp.pop %v1007
        %v1058 = vmul.f32 %v1052, %v1057
        %1059 = vrot.lane.b32.xlu0 %v712, 104
        %v1060 = vpop.permute.xlu0 %1059
        %1061 = vrot.lane.b32.xlu0 %v713, 104
        %v1062 = vpop.permute.xlu0 %1061
        %v1064 = vsel %vm723, %v1060, 0
        %v1067 = vsel %vm723, %v1062, 0
        %1069 = vmatprep.subr.bf16.mxu0 0
        %1070 = vmatpush1.bf16.xpose.msra.mxu0 %v1067
        %1071 = vmatprep.subr.bf16.mxu0 0
        %1072 = vmatpush1.bf16.xpose.msra.mxu0 0
        %1073 = vmatprep.subr.bf16.mxu0 0
        %1074 = vmatpush1.bf16.xpose.msra.mxu0 0
        %1075 = vmatprep.subr.bf16.mxu0 0
        %1076 = vmatpush1.bf16.xpose.msra.mxu0 0
        %1077 = vmatprep.subr.bf16.mxu0 0
        %1078 = vmatpush1.bf16.xpose.msra.mxu0 0
        %1079 = vmatprep.subr.bf16.mxu0 0
        %1080 = vmatpush1.bf16.xpose.msra.mxu0 0
        %1081 = vmatprep.subr.bf16.mxu0 0
        %1082 = vmatpush1.bf16.xpose.msra.mxu0 0
        %1083 = vmatprep.subr.bf16.mxu0 0
        %1084 = vmatpush1.bf16.xpose.msra.mxu0 0
        %1085 = vmatprep.subr.bf16.mxu0 0
        %1086 = vmatpush1.bf16.xpose.msra.mxu0 0
        %1087 = vmatprep.subr.bf16.mxu0 0
        %1088 = vmatpush1.bf16.xpose.msra.mxu0 0
        %1089 = vmatprep.subr.bf16.mxu0 0
        %1090 = vmatpush1.bf16.xpose.msra.mxu0 0
        %1091 = vmatprep.subr.bf16.mxu0 0
        %1092 = vmatpush1.bf16.xpose.msra.mxu0 0
        %1093 = vmatprep.subr.bf16.mxu0 0
        %1094 = vmatpush1.bf16.xpose.msra.mxu0 0
        %1095 = vmatprep.subr.bf16.mxu0 0
        %1096 = vmatpush1.bf16.xpose.msra.mxu0 0
        %1097 = vmatprep.subr.bf16.mxu0 0
        %1098 = vmatpush1.bf16.xpose.msra.mxu0 0
        %1099 = vmatprep.subr.bf16.mxu0 0
        %1100 = vmatpush1.bf16.xpose.msra.mxu0 0
        %1101 = vmatprep.mubr.bf16.mxu0 0
        %1102 = vmatmul.mubr.bf16.gmra.mrb[0].mxu0 %v1064
        %v1103 = vpop.f32.mrb[0].mxu0
        %v1104 = vadd.f32 0.0, %v1103
        %v1105 = vpop.f32.mrb[0].mxu0
        %v1106 = vpop.f32.mrb[0].mxu0
        %v1107 = vpop.f32.mrb[0].mxu0
        %1108 = vdwg.mxu0
        %v1109 = vmul.f32 %v1104, 0.35355338
        %v1110 = vadd.f32 %v1109, %v722
        %v1111 = vsel %vm723, %v1110, -inf
        %1112 = vmax.xlane.f32.xlu0 %v1111
        %v1113 = vpop.xlane.xlu0 %1112
        %v1114 = vsub.f32 %v1110, %v1113
        %v1115 = vmul.f32 %v1114, 1.442695
        %v1116 = vpow.pop %v1115
        %v1117 = vsel %vm723, %v1116, 0.0
        %1118 = vadd.xlane.f32.xlu0 %v1117
        %v1119 = vpop.xlane.xlu0 %1118
        %v1120 = vpack.c.bf16 %v1116, %v1116
        %1121 = vrot.lane.b32.xlu0 %v713, 72
        %v1122 = vpop.permute.xlu0 %1121
        %v1124 = vsel %vm723, %v1120, 0
        %v1127 = vsel %vm788, %v1122, 0
        %1129 = vmatprep.subr.bf16.mxu0 0
        %1130 = vmatpush1.bf16.msra.mxu0 %v1127
        %1131 = vmatprep.subr.bf16.mxu0 0
        %1132 = vmatpush1.bf16.msra.mxu0 0
        %1133 = vmatprep.subr.bf16.mxu0 0
        %1134 = vmatpush1.bf16.msra.mxu0 0
        %1135 = vmatprep.subr.bf16.mxu0 0
        %1136 = vmatpush1.bf16.msra.mxu0 0
        %1137 = vmatprep.subr.bf16.mxu0 0
        %1138 = vmatpush1.bf16.msra.mxu0 0
        %1139 = vmatprep.subr.bf16.mxu0 0
        %1140 = vmatpush1.bf16.msra.mxu0 0
        %1141 = vmatprep.subr.bf16.mxu0 0
        %1142 = vmatpush1.bf16.msra.mxu0 0
        %1143 = vmatprep.subr.bf16.mxu0 0
        %1144 = vmatpush1.bf16.msra.mxu0 0
        %1145 = vmatprep.subr.bf16.mxu0 0
        %1146 = vmatpush1.bf16.msra.mxu0 0
        %1147 = vmatprep.subr.bf16.mxu0 0
        %1148 = vmatpush1.bf16.msra.mxu0 0
        %1149 = vmatprep.subr.bf16.mxu0 0
        %1150 = vmatpush1.bf16.msra.mxu0 0
        %1151 = vmatprep.subr.bf16.mxu0 0
        %1152 = vmatpush1.bf16.msra.mxu0 0
        %1153 = vmatprep.subr.bf16.mxu0 0
        %1154 = vmatpush1.bf16.msra.mxu0 0
        %1155 = vmatprep.subr.bf16.mxu0 0
        %1156 = vmatpush1.bf16.msra.mxu0 0
        %1157 = vmatprep.subr.bf16.mxu0 0
        %1158 = vmatpush1.bf16.msra.mxu0 0
        %1159 = vmatprep.subr.bf16.mxu0 0
        %1160 = vmatpush1.bf16.msra.mxu0 0
        %1161 = vmatprep.mubr.bf16.mxu0 0
        %1162 = vmatmul.mubr.bf16.gmra.mrb[0].mxu0 %v1124
        %v1163 = vpop.f32.mrb[0].mxu0
        %v1164 = vadd.f32 0.0, %v1163
        %v1165 = vpop.f32.mrb[0].mxu0
        %v1166 = vpop.f32.mrb[0].mxu0
        %v1167 = vpop.f32.mrb[0].mxu0
        %1168 = vdwg.mxu0
        %v1169 = vrcp.pop %v1119
        %v1170 = vmul.f32 %v1164, %v1169
        %1172 = vrot.lane.b32.xlu0 %v946, 8
        %v1173 = vpop.permute.xlu0 %1172
        %1176 = vrot.lane.b32.xlu0 %v1058, 16
        %v1177 = vpop.permute.xlu0 %1176
        %1180 = vrot.lane.b32.xlu0 %v1170, 24
        %v1181 = vpop.permute.xlu0 %1180
        %v1183 = vsel %vm723, %v833, %v1173
        %vm1184 = vcmask 130048
        %v1185 = vsel %vm1184, %v1183, %v1177
        %vm1186 = vcmask 195584
        %v1187 = vsel %vm1186, %v1185, %v1181
        %v1188 = vpack.c.bf16 %v1187, %v1187
        %v1189 = vld [vmem:[%s4] sm:$0xf]
        %v1190 = vld [vmem:[%s4 + $0x4] sm:$0xf]
        %v1191 = vld [vmem:[%s4 + $0x8] sm:$0xf]
        %v1192 = vld [vmem:[%s4 + $0xc] sm:$0xf]
        %v1193 = vld [vmem:[%s5] sm:$0x1]
        %v1195 = vlaneseq
        %v1196 = vshrl.u32 %v1195, 7
        %v1197 = vsub.s32 0, %v1196
        %v1198 = vrot.slane %v1193, %v1197
        %v1204 = vunpack.c.l.b16 %v1189
        %v1205 = vunpack.c.l.b16 %v1190
        %v1206 = vunpack.c.l.b16 %v1191
        %v1207 = vunpack.c.l.b16 %v1192
        %v1208 = vpack.c.b16 %v1205, %v1204
        %v1209 = vpack.c.b16 %v1207, %v1206
        %v1213 = vsel %vm546, %v1188, 0
        %1215 = vmatprep.subr.bf16.mxu0 0
        %1216 = vmatpush1.bf16.msra.mxu0 %v1208
        %1217 = vmatprep.subr.bf16.mxu0 0
        %1218 = vmatpush1.bf16.msra.mxu0 %v1209
        %1219 = vmatprep.subr.bf16.mxu0 0
        %1220 = vmatpush1.bf16.msra.mxu0 0
        %1221 = vmatprep.subr.bf16.mxu0 0
        %1222 = vmatpush1.bf16.msra.mxu0 0
        %1223 = vmatprep.subr.bf16.mxu0 0
        %1224 = vmatpush1.bf16.msra.mxu0 0
        %1225 = vmatprep.subr.bf16.mxu0 0
        %1226 = vmatpush1.bf16.msra.mxu0 0
        %1227 = vmatprep.subr.bf16.mxu0 0
        %1228 = vmatpush1.bf16.msra.mxu0 0
        %1229 = vmatprep.subr.bf16.mxu0 0
        %1230 = vmatpush1.bf16.msra.mxu0 0
        %1231 = vmatprep.subr.bf16.mxu0 0
        %1232 = vmatpush1.bf16.msra.mxu0 0
        %1233 = vmatprep.subr.bf16.mxu0 0
        %1234 = vmatpush1.bf16.msra.mxu0 0
        %1235 = vmatprep.subr.bf16.mxu0 0
        %1236 = vmatpush1.bf16.msra.mxu0 0
        %1237 = vmatprep.subr.bf16.mxu0 0
        %1238 = vmatpush1.bf16.msra.mxu0 0
        %1239 = vmatprep.subr.bf16.mxu0 0
        %1240 = vmatpush1.bf16.msra.mxu0 0
        %1241 = vmatprep.subr.bf16.mxu0 0
        %1242 = vmatpush1.bf16.msra.mxu0 0
        %1243 = vmatprep.subr.bf16.mxu0 0
        %1244 = vmatpush1.bf16.msra.mxu0 0
        %1245 = vmatprep.subr.bf16.mxu0 0
        %1246 = vmatpush1.bf16.msra.mxu0 0
        %1247 = vmatprep.mubr.bf16.mxu0 0
        %1248 = vmatmul.mubr.bf16.gmra.mrb[0].mxu0 %v1213
        %v1249 = vpop.f32.mrb[0].mxu0
        %v1250 = vadd.f32 %v1198, %v1249
        %v1251 = vpop.f32.mrb[0].mxu0
        %v1252 = vpop.f32.mrb[0].mxu0
        %v1253 = vpop.f32.mrb[0].mxu0
        %1254 = vdwg.mxu0
        %v1255 = vadd.f32 %v544, %v1250
        %v1256 = vsel %vm546, %v1255, 0.0
        %1257 = vadd.xlane.f32.xlu0 %v1256
        %v1258 = vpop.xlane.xlu0 %1257
        %v1259 = vmul.f32 %v1258, %v550
        %v1260 = vsub.f32 %v1255, %v1259
        %v1261 = vmul.f32 %v1260, %v1260
        %v1262 = vsel %vm546, %v1261, 0.0
        %1263 = vadd.xlane.f32.xlu0 %v1262
        %v1264 = vpop.xlane.xlu0 %1263
        %v1265 = vmul.f32 %v1264, %v550
        %v1266 = vadd.f32 %v1265, 1e-05
        %v1267 = vrsqrt.pop %v1266
        %v1268 = vmul.f32 %v1260, %v1267
        %v1269 = vld [vmem:[#allocation5] sm:$0x1]
        %v1271 = vlaneseq
        %v1272 = vshrl.u32 %v1271, 7
        %v1273 = vsub.s32 0, %v1272
        %v1274 = vrot.slane %v1269, %v1273
        %v1276 = vmul.f32 %v1268, %v1274
        %v1277 = vld [vmem:[#allocation7] sm:$0x1]
        %v1279 = vlaneseq
        %v1280 = vshrl.u32 %v1279, 7
        %v1281 = vsub.s32 0, %v1280
        %v1282 = vrot.slane %v1277, %v1281
        %v1284 = vadd.f32 %v1276, %v1282
        %v1285 = vpack.c.bf16 %v1284, %v1284
        %v1286 = vld [vmem:[%s10] sm:$0xf]
        %v1287 = vld [vmem:[%s10 + $0x4] sm:$0xf]
        %v1288 = vld [vmem:[%s10 + $0x8] sm:$0xf]
        %v1289 = vld [vmem:[%s10 + $0xc] sm:$0xf]
        %v1290 = vld [vmem:[%s11] sm:$0x1]
        %v1292 = vlaneseq
        %v1293 = vshrl.u32 %v1292, 7
        %v1294 = vsub.s32 0, %v1293
        %v1295 = vrot.slane %v1290, %v1294
        %v1301 = vunpack.c.l.b16 %v1286
        %v1302 = vunpack.c.l.b16 %v1287
        %v1303 = vunpack.c.l.b16 %v1288
        %v1304 = vunpack.c.l.b16 %v1289
        %v1305 = vpack.c.b16 %v1302, %v1301
        %v1306 = vpack.c.b16 %v1304, %v1303
        %v1310 = vsel %vm546, %v1285, 0
        %1312 = vmatprep.subr.bf16.mxu0 0
        %1313 = vmatpush1.bf16.msra.mxu0 %v1305
        %1314 = vmatprep.subr.bf16.mxu0 0
        %1315 = vmatpush1.bf16.msra.mxu0 %v1306
        %1316 = vmatprep.subr.bf16.mxu0 0
        %1317 = vmatpush1.bf16.msra.mxu0 0
        %1318 = vmatprep.subr.bf16.mxu0 0
        %1319 = vmatpush1.bf16.msra.mxu0 0
        %1320 = vmatprep.subr.bf16.mxu0 0
        %1321 = vmatpush1.bf16.msra.mxu0 0
        %1322 = vmatprep.subr.bf16.mxu0 0
        %1323 = vmatpush1.bf16.msra.mxu0 0
        %1324 = vmatprep.subr.bf16.mxu0 0
        %1325 = vmatpush1.bf16.msra.mxu0 0
        %1326 = vmatprep.subr.bf16.mxu0 0
        %1327 = vmatpush1.bf16.msra.mxu0 0
        %1328 = vmatprep.subr.bf16.mxu0 0
        %1329 = vmatpush1.bf16.msra.mxu0 0
        %1330 = vmatprep.subr.bf16.mxu0 0
        %1331 = vmatpush1.bf16.msra.mxu0 0
        %1332 = vmatprep.subr.bf16.mxu0 0
        %1333 = vmatpush1.bf16.msra.mxu0 0
        %1334 = vmatprep.subr.bf16.mxu0 0
        %1335 = vmatpush1.bf16.msra.mxu0 0
        %1336 = vmatprep.subr.bf16.mxu0 0
        %1337 = vmatpush1.bf16.msra.mxu0 0
        %1338 = vmatprep.subr.bf16.mxu0 0
        %1339 = vmatpush1.bf16.msra.mxu0 0
        %1340 = vmatprep.subr.bf16.mxu0 0
        %1341 = vmatpush1.bf16.msra.mxu0 0
        %1342 = vmatprep.subr.bf16.mxu0 0
        %1343 = vmatpush1.bf16.msra.mxu0 0
        %1344 = vmatprep.mubr.bf16.mxu0 0
        %1345 = vmatmul.mubr.bf16.gmra.mrb[0].mxu0 %v1310
        %v1346 = vpop.f32.mrb[0].mxu0
        %v1347 = vadd.f32 %v1295, %v1346
        %v1348 = vpop.f32.mrb[0].mxu0
        %v1349 = vpop.f32.mrb[0].mxu0
        %v1350 = vpop.f32.mrb[0].mxu0
        %1351 = vdwg.mxu0
        %v1352 = vmax.f32 %v1347, 0.0
        %v1353 = vpack.c.bf16 %v1352, %v1352
        %v1354 = vld [vmem:[%s12] sm:$0xf]
        %v1355 = vld [vmem:[%s12 + $0x4] sm:$0xf]
        %v1356 = vld [vmem:[%s12 + $0x8] sm:$0xf]
        %v1357 = vld [vmem:[%s12 + $0xc] sm:$0xf]
        %v1358 = vld [vmem:[%s12 + $0x10] sm:$0xf]
        %v1359 = vld [vmem:[%s12 + $0x14] sm:$0xf]
        %v1360 = vld [vmem:[%s12 + $0x18] sm:$0xf]
        %v1361 = vld [vmem:[%s12 + $0x1c] sm:$0xf]
        %v1362 = vld [vmem:[%s12 + $0x20] sm:$0xf]
        %v1363 = vld [vmem:[%s12 + $0x24] sm:$0xf]
        %v1364 = vld [vmem:[%s12 + $0x28] sm:$0xf]
        %v1365 = vld [vmem:[%s12 + $0x2c] sm:$0xf]
        %v1366 = vld [vmem:[%s12 + $0x30] sm:$0xf]
        %v1367 = vld [vmem:[%s12 + $0x34] sm:$0xf]
        %v1368 = vld [vmem:[%s12 + $0x38] sm:$0xf]
        %v1369 = vld [vmem:[%s12 + $0x3c] sm:$0xf]
        %v1370 = vld [vmem:[%s13] sm:$0x1]
        %v1372 = vlaneseq
        %v1373 = vshrl.u32 %v1372, 7
        %v1374 = vsub.s32 0, %v1373
        %v1375 = vrot.slane %v1370, %v1374
        %v1393 = vunpack.c.l.b16 %v1354
        %v1394 = vunpack.c.l.b16 %v1355
        %v1395 = vunpack.c.l.b16 %v1356
        %v1396 = vunpack.c.l.b16 %v1357
        %v1397 = vunpack.c.l.b16 %v1358
        %v1398 = vunpack.c.l.b16 %v1359
        %v1399 = vunpack.c.l.b16 %v1360
        %v1400 = vunpack.c.l.b16 %v1361
        %v1401 = vunpack.c.l.b16 %v1362
        %v1402 = vunpack.c.l.b16 %v1363
        %v1403 = vunpack.c.l.b16 %v1364
        %v1404 = vunpack.c.l.b16 %v1365
        %v1405 = vunpack.c.l.b16 %v1366
        %v1406 = vunpack.c.l.b16 %v1367
        %v1407 = vunpack.c.l.b16 %v1368
        %v1408 = vunpack.c.l.b16 %v1369
        %v1409 = vpack.c.b16 %v1394, %v1393
        %v1410 = vpack.c.b16 %v1396, %v1395
        %v1411 = vpack.c.b16 %v1398, %v1397
        %v1412 = vpack.c.b16 %v1400, %v1399
        %v1413 = vpack.c.b16 %v1402, %v1401
        %v1414 = vpack.c.b16 %v1404, %v1403
        %v1415 = vpack.c.b16 %v1406, %v1405
        %v1416 = vpack.c.b16 %v1408, %v1407
        %1425 = vmatprep.subr.bf16.mxu0 0
        %1426 = vmatpush1.bf16.msra.mxu0 %v1409
        %1427 = vmatprep.subr.bf16.mxu0 0
        %1428 = vmatpush1.bf16.msra.mxu0 %v1410
        %1429 = vmatprep.subr.bf16.mxu0 0
        %1430 = vmatpush1.bf16.msra.mxu0 %v1411
        %1431 = vmatprep.subr.bf16.mxu0 0
        %1432 = vmatpush1.bf16.msra.mxu0 %v1412
        %1433 = vmatprep.subr.bf16.mxu0 0
        %1434 = vmatpush1.bf16.msra.mxu0 %v1413
        %1435 = vmatprep.subr.bf16.mxu0 0
        %1436 = vmatpush1.bf16.msra.mxu0 %v1414
        %1437 = vmatprep.subr.bf16.mxu0 0
        %1438 = vmatpush1.bf16.msra.mxu0 %v1415
        %1439 = vmatprep.subr.bf16.mxu0 0
        %1440 = vmatpush1.bf16.msra.mxu0 %v1416
        %1441 = vmatprep.subr.bf16.mxu0 0
        %1442 = vmatpush1.bf16.msra.mxu0 0
        %1443 = vmatprep.subr.bf16.mxu0 0
        %1444 = vmatpush1.bf16.msra.mxu0 0
        %1445 = vmatprep.subr.bf16.mxu0 0
        %1446 = vmatpush1.bf16.msra.mxu0 0
        %1447 = vmatprep.subr.bf16.mxu0 0
        %1448 = vmatpush1.bf16.msra.mxu0 0
        %1449 = vmatprep.subr.bf16.mxu0 0
        %1450 = vmatpush1.bf16.msra.mxu0 0
        %1451 = vmatprep.subr.bf16.mxu0 0
        %1452 = vmatpush1.bf16.msra.mxu0 0
        %1453 = vmatprep.subr.bf16.mxu0 0
        %1454 = vmatpush1.bf16.msra.mxu0 0
        %1455 = vmatprep.subr.bf16.mxu0 0
        %1456 = vmatpush1.bf16.msra.mxu0 0
        %1457 = vmatprep.mubr.bf16.mxu0 0
        %1458 = vmatmul.mubr.bf16.gmra.mrb[0].mxu0 %v1353
        %v1459 = vpop.f32.mrb[0].mxu0
        %v1460 = vadd.f32 %v1375, %v1459
        %v1461 = vpop.f32.mrb[0].mxu0
        %v1462 = vpop.f32.mrb[0].mxu0
        %v1463 = vpop.f32.mrb[0].mxu0
        %1464 = vdwg.mxu0
        %v1465 = vadd.f32 %v1255, %v1460
        %1466 = vst.msk [vmem:[%s531] sm:$0xff] %vm546, %v1465
        %s1467 = sand.u32 %s358, 1
        %s1468 = scalar_lea.sflag [#allocation4], %s1467
        %s1469 = sand.u32 %s358, 1
        %s1470 = smul.addr %s1469, 8
        %s1471 = scalar_lea.vmem [#allocation8], %s1470
        // Predicated region
        $region89: #{tpu_custom_call.1} parent=75 // pred_check
          %p1472 = pneg %p368
        $region90: #{tpu_custom_call.1} parent=75 // pred_check_branch
          %1474 = sbr.rel (%p1472) target = $region92
        $region91: #{tpu_custom_call.1} parent=75 // pred_region
          %s1476 = ssub.s32 128, 128
          %1477 = vsyncadd %s1468, %s1476
          %s1478 = sadd.s32 %s35, %s34
          %s1479 = smul.addr %s1478, 128
          %s1480 = scalar_lea.hbm %s14, %s1479
          %s1482 = sshll.u32 %s1471, 4
          %s1483 = int_to_ptr.vmem [resolvable:$true] %s1482
          %1485 = dma.vmem_to_hbm [thread:$0]  %s1483, 128, %s1480, %s1468
        $region92: #{tpu_custom_call.1} parent=75 // pred_fallthru
          _
      $region76: #{tpu_custom_call.1} parent=5 // pred_fallthru
        _
      %p1486 = scmp.le.s32.totalorder 2, %s25
      // Predicated region
      $region93: #{tpu_custom_call.1} parent=5 // pred_check
        %p1487 = pneg %p1486
      $region94: #{tpu_custom_call.1} parent=5 // pred_check_branch
        %1489 = sbr.rel (%p1487) target = $region96
      $region95: #{tpu_custom_call.1} parent=5 // pred_region
        %s1490 = ssub.s32 %s25, 2
        // Predicated region
        $region97: #{tpu_custom_call.1} parent=95 // pred_check
          %p1491 = pneg %p374
        $region98: #{tpu_custom_call.1} parent=95 // pred_check_branch
          %1493 = sbr.rel (%p1491) target = $region100
        $region99: #{tpu_custom_call.1} parent=95 // pred_region
          %s1494 = sand.u32 %s359, 1
          %s1495 = scalar_lea.sflag [#allocation4], %s1494
          %s1496 = sand.u32 %s359, 1
          %s1497 = smul.addr %s1496, 8
          %s1498 = scalar_lea.vmem [#allocation8], %s1497
          %1499 = dma.done %s1495, 128
        $region100: #{tpu_custom_call.1} parent=95 // pred_fallthru
          _
      $region96: #{tpu_custom_call.1} parent=5 // pred_fallthru
        _
    $region6: #{tpu_custom_call.1} parent=1 // loop_footer
      %s29 = sadd.s32 1, %s25
    $region7: #{tpu_custom_call.1} parent=1 // loop_footer_branch
      %24 = sbr.rel target = $region3
    $region8: #{tpu_custom_call.1} parent=1 // loop_exit
      _
    %1500 = vsyncpa [#allocation3], 1
    %s1501 = scalar_lea.sflag [#allocation3], 1
    %1502 = vsyncpa %s1501, 1
    %1503 = vsyncpa [#allocation6], 1
    %1504 = vsyncpa [#allocation4], 1
    %s1505 = scalar_lea.sflag [#allocation4], 1
    %1506 = vsyncpa %s1505, 1

</llo_original>
